<compile_context>
chip_gen: v6e
topology: v6e:2x2x1
jax: 0.10.0
libtpu: 0.0.40
codegen_flags: <defaults>
</compile_context>

<pallas_src>
import functools
import numpy as np
import jax
import jax.numpy as jnp
from jax.experimental import pallas as pl
from jax.experimental.pallas import tpu as pltpu


# ---------------------------------------------------------------------------
# In-kernel helpers (f32 math)
# ---------------------------------------------------------------------------
def _layernorm(v, g, b, eps=1e-5):
    mu = jnp.mean(v, axis=-1, keepdims=True)
    var = jnp.mean((v - mu) ** 2, axis=-1, keepdims=True)
    return (v - mu) * jax.lax.rsqrt(var + eps) * g + b


def _gelu_exact(v):
    # matches torch.nn.GELU() default (erf formulation); tanh approx would be
    # cheaper (EUP) but deviates slightly from torch numerics.
    return 0.5 * v * (1.0 + jax.lax.erf(v * np.float32(1.0 / np.sqrt(2.0))))


# ---------------------------------------------------------------------------
# Pallas kernel: one (batch block, mixer layer) per grid step
# ---------------------------------------------------------------------------
def mixer_kernel(patches_ref, pw_ref, pb_ref,
                 ln1g_ref, ln1b_ref, tw1_ref, tb1_ref, tw2_ref, tb2_ref,
                 ln2g_ref, ln2b_ref, cw1_ref, cb1_ref, cw2_ref, cb2_ref,
                 fg_ref, fb_ref, out_ref, *, block_b, num_patches, resident):
    l = pl.program_id(1)
    n_layers = pl.num_programs(1)
    N = num_patches
    li = l if resident else 0          # layer index into the weight refs

    # ---- patch embedding: Linear(P*C -> dim), only on the first depth step ----
    @pl.when(l == 0)
    def _():
        x0 = jnp.dot(patches_ref[...], pw_ref[...],           # bf16 x bf16 -> f32
                     preferred_element_type=jnp.float32)
        out_ref[...] = x0 + pb_ref[...]

    x = out_ref[...]                                           # (BBN, D) f32 residual
    D = x.shape[-1]

    # ---- token mixing: PreNormResidual(LayerNorm(dim), Conv1d-k1 MLP over N) ----
    x3 = x.reshape(block_b, N, D)                              # free: N % 8 == 0
    xn3 = _layernorm(x3, ln1g_ref[li], ln1b_ref[li]).astype(jnp.bfloat16)
    w1 = jnp.broadcast_to(tw1_ref[li], (block_b,) + tuple(tw1_ref.shape[-2:]))
    w2 = jnp.broadcast_to(tw2_ref[li], (block_b,) + tuple(tw2_ref.shape[-2:]))
    h = jnp.einsum('bin,bnd->bid', w1, xn3,
                   preferred_element_type=jnp.float32) + tb1_ref[li]
    h = _gelu_exact(h).astype(jnp.bfloat16)                    # (bb, It, D)
    t = jnp.einsum('bni,bid->bnd', w2, h,
                   preferred_element_type=jnp.float32) + tb2_ref[li]
    x = x + t.reshape(block_b * N, D)

    # ---- channel mixing: PreNormResidual(LayerNorm(dim), Linear MLP over D) ----
    xn = _layernorm(x, ln2g_ref[li], ln2b_ref[li]).astype(jnp.bfloat16)
    h = jnp.dot(xn, cw1_ref[li], preferred_element_type=jnp.float32) + cb1_ref[li]
    h = _gelu_exact(h).astype(jnp.bfloat16)                    # (BBN, Ic)
    t = jnp.dot(h, cw2_ref[li], preferred_element_type=jnp.float32) + cb2_ref[li]
    x = x + t

    # ---- carry residual in out_ref; final LayerNorm after the last layer ----
    @pl.when(l < n_layers - 1)
    def _():
        out_ref[...] = x

    @pl.when(l == n_layers - 1)
    def _():
        out_ref[...] = _layernorm(x, fg_ref[...], fb_ref[...])


PARAM_ORDER = ("patch_w", "patch_b",
               "ln1_g", "ln1_b", "tok_w1", "tok_b1", "tok_w2", "tok_b2",
               "ln2_g", "ln2_b", "ch_w1", "ch_b1", "ch_w2", "ch_b2",
               "final_g", "final_b")


# ---------------------------------------------------------------------------
# Sizing helpers
# ---------------------------------------------------------------------------
def _round_up(v, m):
    return ((v + m - 1) // m) * m


def _padded_bytes(shape, dtype):
    """Approximate VMEM footprint after (8, 128) tiling of the last two dims."""
    itemsize = np.dtype(dtype).itemsize
    if len(shape) == 1:
        return _round_up(int(shape[0]) * itemsize, 4 * 128)
    lead = int(np.prod(shape[:-2])) if len(shape) > 2 else 1
    return lead * _round_up(int(shape[-2]), 8) * _round_up(int(shape[-1]), 128) * itemsize


def _choose_block_b(B, N, target_rows=1024):
    """Pick batch-block size so block_b*N ~ target_rows (fills the MXU M dim)."""
    bb = min(B, max(1, target_rows // N))
    while B % bb:
        bb -= 1
    # Prefer >=2 batch blocks (both TensorCores on v7x) when the halved block
    # still gives a reasonably large M dimension.
    if B // bb == 1 and B % 2 == 0 and (B // 2) * N >= 256:
        bb = B // 2
    return bb


# ---------------------------------------------------------------------------
# Wrapper
# ---------------------------------------------------------------------------
def mlp_mixer_forward(x, params, *, patch_size, depth, block_b=None):
    B, C, L = x.shape
    P = patch_size
    assert L % P == 0
    N = L // P
    assert N % 8 == 0, "num_patches must be a multiple of 8 for this kernel"
    PC = P * C
    D = params["patch_w"].shape[1]
    It = params["tok_w1"].shape[1]
    Ic = params["ch_w1"].shape[2]

    # Rearrange('b c (n p) -> b n (p c)') flattened to (B*N, P*C); bf16 because
    # the slab is only ever consumed as an MXU operand.
    patches = (x.reshape(B, C, N, P).transpose(0, 2, 3, 1)
                .reshape(B * N, PC).astype(jnp.bfloat16))

    if block_b is None:
        block_b = _choose_block_b(B, N)
    num_bb = B // block_b
    BBN = block_b * N

    weights = [params[k] for k in PARAM_ORDER]
    layer_params = [w for w in weights if w.ndim == 3]
    layer_bytes = sum(_padded_bytes(w.shape, w.dtype) for w in layer_params)
    # Keep the whole depth-stack resident when small (conservative so it also
    # fits next to activation blocks inside v7x's 64 MiB VMEM).
    resident = layer_bytes <= 12 * 1024 * 1024

    def const_spec(a):            # shared by every grid step (fetched once)
        nd = a.ndim
        return pl.BlockSpec(a.shape, lambda bb, l, _nd=nd: (0,) * _nd)

    def layer_spec(a):            # (depth, ...) params streamed per layer
        nd = a.ndim
        return pl.BlockSpec((1,) + a.shape[1:],
                            lambda bb, l, _nd=nd: (l,) + (0,) * (_nd - 1))

    weight_specs = [const_spec(w) if (w.ndim != 3 or resident) else layer_spec(w)
                    for w in weights]

    # VMEM budget estimate (double-buffered patches/out + weights + temporaries)
    est = 2 * _padded_bytes((BBN, PC), jnp.bfloat16)
    est += 2 * _padded_bytes((BBN, D), jnp.float32)
    if resident:
        est += layer_bytes
    else:
        est += 2 * sum(_padded_bytes(w.shape[1:], w.dtype) for w in layer_params)
    est += sum(_padded_bytes(w.shape, w.dtype) for w in weights if w.ndim != 3)
    est += 6 * _padded_bytes((BBN, max(D, Ic)), jnp.float32)
    est += 3 * _padded_bytes((block_b * It, D), jnp.float32)
    vmem_limit = int(min(max(32 * 1024 * 1024, 2 * est), 48 * 1024 * 1024))

    kernel = functools.partial(mixer_kernel, block_b=block_b, num_patches=N,
                               resident=resident)
    out_flat = pl.pallas_call(
        kernel,
        out_shape=jax.ShapeDtypeStruct((B * N, D), jnp.float32),
        grid=(num_bb, depth),
        in_specs=[pl.BlockSpec((BBN, PC), lambda bb, l: (bb, 0))] + weight_specs,
        out_specs=pl.BlockSpec((BBN, D), lambda bb, l: (bb, 0)),
        compiler_params=pltpu.CompilerParams(
            dimension_semantics=("parallel", "arbitrary"),
            vmem_limit_bytes=vmem_limit),
    )(patches, *weights)
    return out_flat.reshape(B, N, D)


# ---------------------------------------------------------------------------
# Deterministic synthetic parameters (shapes from MLPMixer.__init__)
# ---------------------------------------------------------------------------
def init_params(key, *, in_chan, len_seq, patch_size, dim, depth,
                expansion_factor=4.0, expansion_factor_token=0.5):
    N = len_seq // patch_size
    inner_tok = int(N * expansion_factor)           # Conv1d hidden (token mix)
    inner_ch = int(dim * expansion_factor_token)    # Linear hidden (channel mix)

    keys = iter(jax.random.split(key, 32))

    def nrm(shape, dtype=jnp.float32):
        return (0.02 * jax.random.normal(next(keys), shape, dtype=jnp.float32)).astype(dtype)

    wdt = jnp.bfloat16  # matmul weights stored bf16 (MXU-native), rest f32
    # Torch stores Linear weight as (out, in) and Conv1d weight as (out, in, 1);
    # here weights are laid out for the kernel's dot order.
    return {
        "patch_w": nrm((patch_size * in_chan, dim), wdt),   # Linear(P*C, dim).weight.T
        "patch_b": nrm((1, dim)),
        "ln1_g": jnp.ones((depth, 1, dim), jnp.float32),
        "ln1_b": jnp.zeros((depth, 1, dim), jnp.float32),
        "tok_w1": nrm((depth, inner_tok, N), wdt),          # Conv1d(N, It, 1).weight
        "tok_b1": nrm((depth, inner_tok, 1)),
        "tok_w2": nrm((depth, N, inner_tok), wdt),          # Conv1d(It, N, 1).weight
        "tok_b2": nrm((depth, N, 1)),
        "ln2_g": jnp.ones((depth, 1, dim), jnp.float32),
        "ln2_b": jnp.zeros((depth, 1, dim), jnp.float32),
        "ch_w1": nrm((depth, dim, inner_ch), wdt),          # Linear(dim, Ic).weight.T
        "ch_b1": nrm((depth, 1, inner_ch)),
        "ch_w2": nrm((depth, inner_ch, dim), wdt),          # Linear(Ic, dim).weight.T
        "ch_b2": nrm((depth, 1, dim)),
        "final_g": jnp.ones((1, dim), jnp.float32),
        "final_b": jnp.zeros((1, dim), jnp.float32),
    }


# ---------------------------------------------------------------------------
# Pure-JAX f32 reference (mirrors the PyTorch forward) for correctness check
# ---------------------------------------------------------------------------
def mlp_mixer_reference(x, p, *, patch_size, depth):
    f32 = lambda a: a.astype(jnp.float32)
    B, C, L = x.shape
    P = patch_size
    N = L // P
    patches = x.reshape(B, C, N, P).transpose(0, 2, 3, 1).reshape(B, N, P * C)

    def ln(v, g, b):
        mu = jnp.mean(v, axis=-1, keepdims=True)
        var = jnp.mean((v - mu) ** 2, axis=-1, keepdims=True)
        return (v - mu) / jnp.sqrt(var + 1e-5) * g + b

    gelu = lambda v: jax.nn.gelu(v, approximate=False)

    h = patches @ f32(p["patch_w"]) + p["patch_b"]
    for l in range(depth):
        xn = ln(h, p["ln1_g"][l], p["ln1_b"][l])
        t = jnp.einsum("on,bnd->bod", f32(p["tok_w1"][l]), xn) + p["tok_b1"][l]
        t = jnp.einsum("no,bod->bnd", f32(p["tok_w2"][l]), gelu(t)) + p["tok_b2"][l]
        h = h + t
        xn = ln(h, p["ln2_g"][l], p["ln2_b"][l])
        t = gelu(xn @ f32(p["ch_w1"][l]) + p["ch_b1"][l])
        t = t @ f32(p["ch_w2"][l]) + p["ch_b2"][l]
        h = h + t
    return ln(h, p["final_g"], p["final_b"])


if __name__ == "__main__":
    # small shapes consistent with the module (lane-dense dim, N multiple of 8)
    B, C, L = 2, 4, 256
    patch_size, dim, depth = 8, 128, 2   # N = 32, inner_tok = 128, inner_ch = 64

    key = jax.random.PRNGKey(0)
    kx, kp = jax.random.split(key)
    x = jax.random.normal(kx, (B, C, L), dtype=jnp.float32)
    params = init_params(kp, in_chan=C, len_seq=L, patch_size=patch_size,
                         dim=dim, depth=depth,
                         expansion_factor=4.0, expansion_factor_token=0.5)

    out = mlp_mixer_forward(x, params, patch_size=patch_size, depth=depth)
    out = jax.block_until_ready(out)

    ref = mlp_mixer_reference(x, params, patch_size=patch_size, depth=depth)
    # bf16 MXU matmuls with f32 accumulation vs f32 reference -> slightly looser tol
    np.testing.assert_allclose(np.asarray(out), np.asarray(ref), rtol=2e-2, atol=2e-2)

    # TODO(synk): Dropout layers (p=0.0) are identity in eval mode and are omitted.
    print("KERNEL_OK")
</pallas_src>

<mosaic_0001>
module attributes {stable_mosaic.version = 11 : i64} {
  func.func @mixer_kernel(%arg0: i32, %arg1: i32, %arg2: memref<64x32xbf16, #tpu.memory_space<vmem>>, %arg3: memref<32x128xbf16, #tpu.memory_space<vmem>>, %arg4: memref<1x128xf32, #tpu.memory_space<vmem>>, %arg5: memref<2x1x128xf32, #tpu.memory_space<vmem>>, %arg6: memref<2x1x128xf32, #tpu.memory_space<vmem>>, %arg7: memref<2x128x32xbf16, #tpu.memory_space<vmem>>, %arg8: memref<2x128x1xf32, #tpu.memory_space<vmem>>, %arg9: memref<2x32x128xbf16, #tpu.memory_space<vmem>>, %arg10: memref<2x32x1xf32, #tpu.memory_space<vmem>>, %arg11: memref<2x1x128xf32, #tpu.memory_space<vmem>>, %arg12: memref<2x1x128xf32, #tpu.memory_space<vmem>>, %arg13: memref<2x128x64xbf16, #tpu.memory_space<vmem>>, %arg14: memref<2x1x64xf32, #tpu.memory_space<vmem>>, %arg15: memref<2x64x128xbf16, #tpu.memory_space<vmem>>, %arg16: memref<2x1x128xf32, #tpu.memory_space<vmem>>, %arg17: memref<1x128xf32, #tpu.memory_space<vmem>>, %arg18: memref<1x128xf32, #tpu.memory_space<vmem>>, %arg19: memref<64x128xf32, #tpu.memory_space<vmem>>) attributes {dimension_semantics = [#tpu.dimension_semantics<parallel>, #tpu.dimension_semantics<arbitrary>], iteration_bounds = array<i64: 1, 2>, scalar_prefetch = 0 : i64, scratch_operands = 0 : i64, tpu.core_type = #tpu.core_type<tc>, window_params = [{transform_indices = @transform_0, window_bounds = array<i64: 64, 32>}, {pipeline_mode = #tpu.pipeline_mode<synchronous>, transform_indices = @transform_1, window_bounds = array<i64: 32, 128>}, {pipeline_mode = #tpu.pipeline_mode<synchronous>, transform_indices = @transform_2, window_bounds = array<i64: 1, 128>}, {pipeline_mode = #tpu.pipeline_mode<synchronous>, transform_indices = @transform_3, window_bounds = array<i64: 2, 1, 128>}, {pipeline_mode = #tpu.pipeline_mode<synchronous>, transform_indices = @transform_4, window_bounds = array<i64: 2, 1, 128>}, {pipeline_mode = #tpu.pipeline_mode<synchronous>, transform_indices = @transform_5, window_bounds = array<i64: 2, 128, 32>}, {pipeline_mode = #tpu.pipeline_mode<synchronous>, transform_indices = @transform_6, window_bounds = array<i64: 2, 128, 1>}, {pipeline_mode = #tpu.pipeline_mode<synchronous>, transform_indices = @transform_7, window_bounds = array<i64: 2, 32, 128>}, {pipeline_mode = #tpu.pipeline_mode<synchronous>, transform_indices = @transform_8, window_bounds = array<i64: 2, 32, 1>}, {pipeline_mode = #tpu.pipeline_mode<synchronous>, transform_indices = @transform_9, window_bounds = array<i64: 2, 1, 128>}, {pipeline_mode = #tpu.pipeline_mode<synchronous>, transform_indices = @transform_10, window_bounds = array<i64: 2, 1, 128>}, {pipeline_mode = #tpu.pipeline_mode<synchronous>, transform_indices = @transform_11, window_bounds = array<i64: 2, 128, 64>}, {pipeline_mode = #tpu.pipeline_mode<synchronous>, transform_indices = @transform_12, window_bounds = array<i64: 2, 1, 64>}, {pipeline_mode = #tpu.pipeline_mode<synchronous>, transform_indices = @transform_13, window_bounds = array<i64: 2, 64, 128>}, {pipeline_mode = #tpu.pipeline_mode<synchronous>, transform_indices = @transform_14, window_bounds = array<i64: 2, 1, 128>}, {pipeline_mode = #tpu.pipeline_mode<synchronous>, transform_indices = @transform_15, window_bounds = array<i64: 1, 128>}, {pipeline_mode = #tpu.pipeline_mode<synchronous>, transform_indices = @transform_16, window_bounds = array<i64: 1, 128>}, {transform_indices = @transform_17, window_bounds = array<i64: 64, 128>}]} {
    %c0_i32 = arith.constant 0 : i32
    %0 = arith.cmpi eq, %arg1, %c0_i32 : i32
    %1 = arith.extui %0 : i1 to i32
    %c0_i32_0 = arith.constant 0 : i32
    %2 = arith.cmpi ne, %1, %c0_i32_0 : i32
    scf.if %2 {
      %c0_48 = arith.constant 0 : index
      %c0_49 = arith.constant 0 : index
      %134 = vector.load %arg2[%c0_48, %c0_49] : memref<64x32xbf16, #tpu.memory_space<vmem>>, vector<64x32xbf16>
      %c0_50 = arith.constant 0 : index
      %c0_51 = arith.constant 0 : index
      %135 = vector.load %arg3[%c0_50, %c0_51] : memref<32x128xbf16, #tpu.memory_space<vmem>>, vector<32x128xbf16>
      %cst_52 = arith.constant dense<0.000000e+00> : vector<64x128xf32>
      %136 = tpu.matmul %134, %135, %cst_52 {dimension_numbers = #tpu.dot_dimension_numbers<[1], [0], [0], [1], [0, 0, 1, 1], [], []>} : vector<64x32xbf16>, vector<32x128xbf16>, vector<64x128xf32> -> vector<64x128xf32>
      %c0_53 = arith.constant 0 : index
      %c0_54 = arith.constant 0 : index
      %137 = vector.load %arg4[%c0_53, %c0_54] : memref<1x128xf32, #tpu.memory_space<vmem>>, vector<1x128xf32>
      %138 = vector.broadcast %137 : vector<1x128xf32> to vector<64x128xf32>
      %139 = arith.addf %136, %138 : vector<64x128xf32>
      %c0_55 = arith.constant 0 : index
      %c0_56 = arith.constant 0 : index
      %140 = vector.load %arg19[%c0_55, %c0_56] : memref<64x128xf32, #tpu.memory_space<vmem>>, vector<64x128xf32>
      tpu.vector_store %arg19[%c0_55, %c0_56], %139 {strides = array<i32>} : memref<64x128xf32, #tpu.memory_space<vmem>>, vector<64x128xf32>,
    } else {
    }
    %c0 = arith.constant 0 : index
    %c0_1 = arith.constant 0 : index
    %3 = vector.load %arg19[%c0, %c0_1] : memref<64x128xf32, #tpu.memory_space<vmem>>, vector<64x128xf32>
    %4 = vector.shape_cast %3 : vector<64x128xf32> to vector<2x32x128xf32>
    %5 = arith.index_cast %arg1 : i32 to index
    %c0_2 = arith.constant 0 : index
    %c0_3 = arith.constant 0 : index
    %6 = vector.load %arg5[%5, %c0_2, %c0_3] : memref<2x1x128xf32, #tpu.memory_space<vmem>>, vector<1x1x128xf32>
    %7 = vector.shape_cast %6 : vector<1x1x128xf32> to vector<1x128xf32>
    %8 = arith.index_cast %arg1 : i32 to index
    %c0_4 = arith.constant 0 : index
    %c0_5 = arith.constant 0 : index
    %9 = vector.load %arg6[%8, %c0_4, %c0_5] : memref<2x1x128xf32, #tpu.memory_space<vmem>>, vector<1x1x128xf32>
    %10 = vector.shape_cast %9 : vector<1x1x128xf32> to vector<1x128xf32>
    %cst = arith.constant dense<0.000000e+00> : vector<2x32xf32>
    %11 = vector.multi_reduction <add>, %4, %cst [2] : vector<2x32x128xf32> to vector<2x32xf32>
    %12 = vector.shape_cast %11 : vector<2x32xf32> to vector<2x32x1xf32>
    %cst_6 = arith.constant 1.280000e+02 : f32
    %13 = vector.broadcast %cst_6 : f32 to vector<2x32x1xf32>
    %14 = arith.divf %12, %13 : vector<2x32x1xf32>
    %15 = vector.broadcast %14 : vector<2x32x1xf32> to vector<2x32x128xf32>
    %16 = arith.subf %4, %15 : vector<2x32x128xf32>
    %17 = arith.mulf %16, %16 : vector<2x32x128xf32>
    %cst_7 = arith.constant dense<0.000000e+00> : vector<2x32xf32>
    %18 = vector.multi_reduction <add>, %17, %cst_7 [2] : vector<2x32x128xf32> to vector<2x32xf32>
    %19 = vector.shape_cast %18 : vector<2x32xf32> to vector<2x32x1xf32>
    %cst_8 = arith.constant 1.280000e+02 : f32
    %20 = vector.broadcast %cst_8 : f32 to vector<2x32x1xf32>
    %21 = arith.divf %19, %20 : vector<2x32x1xf32>
    %22 = vector.broadcast %14 : vector<2x32x1xf32> to vector<2x32x128xf32>
    %23 = arith.subf %4, %22 : vector<2x32x128xf32>
    %cst_9 = arith.constant 9.99999974E-6 : f32
    %24 = vector.broadcast %cst_9 : f32 to vector<2x32x1xf32>
    %25 = arith.addf %21, %24 : vector<2x32x1xf32>
    %26 = math.rsqrt %25 : vector<2x32x1xf32>
    %27 = vector.broadcast %26 : vector<2x32x1xf32> to vector<2x32x128xf32>
    %28 = arith.mulf %23, %27 : vector<2x32x128xf32>
    %29 = vector.shape_cast %7 : vector<1x128xf32> to vector<1x1x128xf32>
    %30 = vector.broadcast %29 : vector<1x1x128xf32> to vector<2x32x128xf32>
    %31 = arith.mulf %28, %30 : vector<2x32x128xf32>
    %32 = vector.shape_cast %10 : vector<1x128xf32> to vector<1x1x128xf32>
    %33 = vector.broadcast %32 : vector<1x1x128xf32> to vector<2x32x128xf32>
    %34 = arith.addf %31, %33 : vector<2x32x128xf32>
    %35 = arith.truncf %34 : vector<2x32x128xf32> to vector<2x32x128xbf16>
    %36 = arith.index_cast %arg1 : i32 to index
    %c0_10 = arith.constant 0 : index
    %c0_11 = arith.constant 0 : index
    %37 = vector.load %arg7[%36, %c0_10, %c0_11] : memref<2x128x32xbf16, #tpu.memory_space<vmem>>, vector<1x128x32xbf16>
    %38 = vector.shape_cast %37 : vector<1x128x32xbf16> to vector<128x32xbf16>
    %39 = vector.shape_cast %38 : vector<128x32xbf16> to vector<1x128x32xbf16>
    %40 = vector.broadcast %39 : vector<1x128x32xbf16> to vector<2x128x32xbf16>
    %41 = arith.index_cast %arg1 : i32 to index
    %c0_12 = arith.constant 0 : index
    %c0_13 = arith.constant 0 : index
    %42 = vector.load %arg9[%41, %c0_12, %c0_13] : memref<2x32x128xbf16, #tpu.memory_space<vmem>>, vector<1x32x128xbf16>
    %43 = vector.shape_cast %42 : vector<1x32x128xbf16> to vector<32x128xbf16>
    %44 = vector.shape_cast %43 : vector<32x128xbf16> to vector<1x32x128xbf16>
    %45 = vector.broadcast %44 : vector<1x32x128xbf16> to vector<2x32x128xbf16>
    "tpu.trace_start"() <{level = 10 : i32, message = "bin,bnd->bid"}> : () -> ()
    %cst_14 = arith.constant dense<0.000000e+00> : vector<2x128x128xf32>
    %46 = tpu.matmul %40, %35, %cst_14 {dimension_numbers = #tpu.dot_dimension_numbers<[2], [1], [1], [2], [0, 0, 0, 1, 1, 2], [0], [0]>} : vector<2x128x32xbf16>, vector<2x32x128xbf16>, vector<2x128x128xf32> -> vector<2x128x128xf32>
    "tpu.trace_stop"() : () -> ()
    %47 = arith.index_cast %arg1 : i32 to index
    %c0_15 = arith.constant 0 : index
    %c0_16 = arith.constant 0 : index
    %48 = vector.load %arg8[%47, %c0_15, %c0_16] : memref<2x128x1xf32, #tpu.memory_space<vmem>>, vector<1x128x1xf32>
    %49 = vector.shape_cast %48 : vector<1x128x1xf32> to vector<128x1xf32>
    %50 = vector.shape_cast %49 : vector<128x1xf32> to vector<1x128x1xf32>
    %51 = vector.broadcast %50 : vector<1x128x1xf32> to vector<2x128x128xf32>
    %52 = arith.addf %46, %51 : vector<2x128x128xf32>
    %cst_17 = arith.constant 5.000000e-01 : f32
    %53 = vector.broadcast %cst_17 : f32 to vector<2x128x128xf32>
    %54 = arith.mulf %53, %52 : vector<2x128x128xf32>
    %cst_18 = arith.constant 0.707106769 : f32
    %55 = vector.broadcast %cst_18 : f32 to vector<2x128x128xf32>
    %56 = arith.mulf %52, %55 : vector<2x128x128xf32>
    %57 = math.erf %56 : vector<2x128x128xf32>
    %cst_19 = arith.constant 1.000000e+00 : f32
    %58 = vector.broadcast %cst_19 : f32 to vector<2x128x128xf32>
    %59 = arith.addf %58, %57 : vector<2x128x128xf32>
    %60 = arith.mulf %54, %59 : vector<2x128x128xf32>
    %61 = arith.truncf %60 : vector<2x128x128xf32> to vector<2x128x128xbf16>
    "tpu.trace_start"() <{level = 10 : i32, message = "bni,bid->bnd"}> : () -> ()
    %cst_20 = arith.constant dense<0.000000e+00> : vector<2x32x128xf32>
    %62 = tpu.matmul %45, %61, %cst_20 {dimension_numbers = #tpu.dot_dimension_numbers<[2], [1], [1], [2], [0, 0, 0, 1, 1, 2], [0], [0]>} : vector<2x32x128xbf16>, vector<2x128x128xbf16>, vector<2x32x128xf32> -> vector<2x32x128xf32>
    "tpu.trace_stop"() : () -> ()
    %63 = arith.index_cast %arg1 : i32 to index
    %c0_21 = arith.constant 0 : index
    %c0_22 = arith.constant 0 : index
    %64 = vector.load %arg10[%63, %c0_21, %c0_22] : memref<2x32x1xf32, #tpu.memory_space<vmem>>, vector<1x32x1xf32>
    %65 = vector.shape_cast %64 : vector<1x32x1xf32> to vector<32x1xf32>
    %66 = vector.shape_cast %65 : vector<32x1xf32> to vector<1x32x1xf32>
    %67 = vector.broadcast %66 : vector<1x32x1xf32> to vector<2x32x128xf32>
    %68 = arith.addf %62, %67 : vector<2x32x128xf32>
    %69 = vector.shape_cast %68 : vector<2x32x128xf32> to vector<64x128xf32>
    %70 = arith.addf %3, %69 : vector<64x128xf32>
    %71 = arith.index_cast %arg1 : i32 to index
    %c0_23 = arith.constant 0 : index
    %c0_24 = arith.constant 0 : index
    %72 = vector.load %arg11[%71, %c0_23, %c0_24] : memref<2x1x128xf32, #tpu.memory_space<vmem>>, vector<1x1x128xf32>
    %73 = vector.shape_cast %72 : vector<1x1x128xf32> to vector<1x128xf32>
    %74 = arith.index_cast %arg1 : i32 to index
    %c0_25 = arith.constant 0 : index
    %c0_26 = arith.constant 0 : index
    %75 = vector.load %arg12[%74, %c0_25, %c0_26] : memref<2x1x128xf32, #tpu.memory_space<vmem>>, vector<1x1x128xf32>
    %76 = vector.shape_cast %75 : vector<1x1x128xf32> to vector<1x128xf32>
    %cst_27 = arith.constant dense<0.000000e+00> : vector<64xf32>
    %77 = vector.multi_reduction <add>, %70, %cst_27 [1] : vector<64x128xf32> to vector<64xf32>
    %78 = vector.shape_cast %77 : vector<64xf32> to vector<64x1xf32>
    %cst_28 = arith.constant 1.280000e+02 : f32
    %79 = vector.broadcast %cst_28 : f32 to vector<64x1xf32>
    %80 = arith.divf %78, %79 : vector<64x1xf32>
    %81 = vector.broadcast %80 : vector<64x1xf32> to vector<64x128xf32>
    %82 = arith.subf %70, %81 : vector<64x128xf32>
    %83 = arith.mulf %82, %82 : vector<64x128xf32>
    %cst_29 = arith.constant dense<0.000000e+00> : vector<64xf32>
    %84 = vector.multi_reduction <add>, %83, %cst_29 [1] : vector<64x128xf32> to vector<64xf32>
    %85 = vector.shape_cast %84 : vector<64xf32> to vector<64x1xf32>
    %cst_30 = arith.constant 1.280000e+02 : f32
    %86 = vector.broadcast %cst_30 : f32 to vector<64x1xf32>
    %87 = arith.divf %85, %86 : vector<64x1xf32>
    %88 = vector.broadcast %80 : vector<64x1xf32> to vector<64x128xf32>
    %89 = arith.subf %70, %88 : vector<64x128xf32>
    %cst_31 = arith.constant 9.99999974E-6 : f32
    %90 = vector.broadcast %cst_31 : f32 to vector<64x1xf32>
    %91 = arith.addf %87, %90 : vector<64x1xf32>
    %92 = math.rsqrt %91 : vector<64x1xf32>
    %93 = vector.broadcast %92 : vector<64x1xf32> to vector<64x128xf32>
    %94 = arith.mulf %89, %93 : vector<64x128xf32>
    %95 = vector.broadcast %73 : vector<1x128xf32> to vector<64x128xf32>
    %96 = arith.mulf %94, %95 : vector<64x128xf32>
    %97 = vector.broadcast %76 : vector<1x128xf32> to vector<64x128xf32>
    %98 = arith.addf %96, %97 : vector<64x128xf32>
    %99 = arith.truncf %98 : vector<64x128xf32> to vector<64x128xbf16>
    %100 = arith.index_cast %arg1 : i32 to index
    %c0_32 = arith.constant 0 : index
    %c0_33 = arith.constant 0 : index
    %101 = vector.load %arg13[%100, %c0_32, %c0_33] : memref<2x128x64xbf16, #tpu.memory_space<vmem>>, vector<1x128x64xbf16>
    %102 = vector.shape_cast %101 : vector<1x128x64xbf16> to vector<128x64xbf16>
    %cst_34 = arith.constant dense<0.000000e+00> : vector<64x64xf32>
    %103 = tpu.matmul %99, %102, %cst_34 {dimension_numbers = #tpu.dot_dimension_numbers<[1], [0], [0], [1], [0, 0, 1, 1], [], []>} : vector<64x128xbf16>, vector<128x64xbf16>, vector<64x64xf32> -> vector<64x64xf32>
    %104 = arith.index_cast %arg1 : i32 to index
    %c0_35 = arith.constant 0 : index
    %c0_36 = arith.constant 0 : index
    %105 = vector.load %arg14[%104, %c0_35, %c0_36] : memref<2x1x64xf32, #tpu.memory_space<vmem>>, vector<1x1x64xf32>
    %106 = vector.shape_cast %105 : vector<1x1x64xf32> to vector<1x64xf32>
    %107 = vector.broadcast %106 : vector<1x64xf32> to vector<64x64xf32>
    %108 = arith.addf %103, %107 : vector<64x64xf32>
    %cst_37 = arith.constant 5.000000e-01 : f32
    %109 = vector.broadcast %cst_37 : f32 to vector<64x64xf32>
    %110 = arith.mulf %109, %108 : vector<64x64xf32>
    %cst_38 = arith.constant 0.707106769 : f32
    %111 = vector.broadcast %cst_38 : f32 to vector<64x64xf32>
    %112 = arith.mulf %108, %111 : vector<64x64xf32>
    %113 = math.erf %112 : vector<64x64xf32>
    %cst_39 = arith.constant 1.000000e+00 : f32
    %114 = vector.broadcast %cst_39 : f32 to vector<64x64xf32>
    %115 = arith.addf %114, %113 : vector<64x64xf32>
    %116 = arith.mulf %110, %115 : vector<64x64xf32>
    %117 = arith.truncf %116 : vector<64x64xf32> to vector<64x64xbf16>
    %118 = arith.index_cast %arg1 : i32 to index
    %c0_40 = arith.constant 0 : index
    %c0_41 = arith.constant 0 : index
    %119 = vector.load %arg15[%118, %c0_40, %c0_41] : memref<2x64x128xbf16, #tpu.memory_space<vmem>>, vector<1x64x128xbf16>
    %120 = vector.shape_cast %119 : vector<1x64x128xbf16> to vector<64x128xbf16>
    %cst_42 = arith.constant dense<0.000000e+00> : vector<64x128xf32>
    %121 = tpu.matmul %117, %120, %cst_42 {dimension_numbers = #tpu.dot_dimension_numbers<[1], [0], [0], [1], [0, 0, 1, 1], [], []>} : vector<64x64xbf16>, vector<64x128xbf16>, vector<64x128xf32> -> vector<64x128xf32>
    %122 = arith.index_cast %arg1 : i32 to index
    %c0_43 = arith.constant 0 : index
    %c0_44 = arith.constant 0 : index
    %123 = vector.load %arg16[%122, %c0_43, %c0_44] : memref<2x1x128xf32, #tpu.memory_space<vmem>>, vector<1x1x128xf32>
    %124 = vector.shape_cast %123 : vector<1x1x128xf32> to vector<1x128xf32>
    %125 = vector.broadcast %124 : vector<1x128xf32> to vector<64x128xf32>
    %126 = arith.addf %121, %125 : vector<64x128xf32>
    %127 = arith.addf %70, %126 : vector<64x128xf32>
    %c1_i32 = arith.constant 1 : i32
    %128 = arith.cmpi slt, %arg1, %c1_i32 : i32
    %129 = arith.extui %128 : i1 to i32
    %c0_i32_45 = arith.constant 0 : i32
    %130 = arith.cmpi ne, %129, %c0_i32_45 : i32
    scf.if %130 {
      %c0_48 = arith.constant 0 : index
      %c0_49 = arith.constant 0 : index
      %134 = vector.load %arg19[%c0_48, %c0_49] : memref<64x128xf32, #tpu.memory_space<vmem>>, vector<64x128xf32>
      tpu.vector_store %arg19[%c0_48, %c0_49], %127 {strides = array<i32>} : memref<64x128xf32, #tpu.memory_space<vmem>>, vector<64x128xf32>,
    } else {
    }
    %c1_i32_46 = arith.constant 1 : i32
    %131 = arith.cmpi eq, %arg1, %c1_i32_46 : i32
    %132 = arith.extui %131 : i1 to i32
    %c0_i32_47 = arith.constant 0 : i32
    %133 = arith.cmpi ne, %132, %c0_i32_47 : i32
    scf.if %133 {
      %c0_48 = arith.constant 0 : index
      %c0_49 = arith.constant 0 : index
      %134 = vector.load %arg17[%c0_48, %c0_49] : memref<1x128xf32, #tpu.memory_space<vmem>>, vector<1x128xf32>
      %c0_50 = arith.constant 0 : index
      %c0_51 = arith.constant 0 : index
      %135 = vector.load %arg18[%c0_50, %c0_51] : memref<1x128xf32, #tpu.memory_space<vmem>>, vector<1x128xf32>
      %cst_52 = arith.constant dense<0.000000e+00> : vector<64xf32>
      %136 = vector.multi_reduction <add>, %127, %cst_52 [1] : vector<64x128xf32> to vector<64xf32>
      %137 = vector.shape_cast %136 : vector<64xf32> to vector<64x1xf32>
      %cst_53 = arith.constant 1.280000e+02 : f32
      %138 = vector.broadcast %cst_53 : f32 to vector<64x1xf32>
      %139 = arith.divf %137, %138 : vector<64x1xf32>
      %140 = vector.broadcast %139 : vector<64x1xf32> to vector<64x128xf32>
      %141 = arith.subf %127, %140 : vector<64x128xf32>
      %142 = arith.mulf %141, %141 : vector<64x128xf32>
      %cst_54 = arith.constant dense<0.000000e+00> : vector<64xf32>
      %143 = vector.multi_reduction <add>, %142, %cst_54 [1] : vector<64x128xf32> to vector<64xf32>
      %144 = vector.shape_cast %143 : vector<64xf32> to vector<64x1xf32>
      %cst_55 = arith.constant 1.280000e+02 : f32
      %145 = vector.broadcast %cst_55 : f32 to vector<64x1xf32>
      %146 = arith.divf %144, %145 : vector<64x1xf32>
      %147 = vector.broadcast %139 : vector<64x1xf32> to vector<64x128xf32>
      %148 = arith.subf %127, %147 : vector<64x128xf32>
      %cst_56 = arith.constant 9.99999974E-6 : f32
      %149 = vector.broadcast %cst_56 : f32 to vector<64x1xf32>
      %150 = arith.addf %146, %149 : vector<64x1xf32>
      %151 = math.rsqrt %150 : vector<64x1xf32>
      %152 = vector.broadcast %151 : vector<64x1xf32> to vector<64x128xf32>
      %153 = arith.mulf %148, %152 : vector<64x128xf32>
      %154 = vector.broadcast %134 : vector<1x128xf32> to vector<64x128xf32>
      %155 = arith.mulf %153, %154 : vector<64x128xf32>
      %156 = vector.broadcast %135 : vector<1x128xf32> to vector<64x128xf32>
      %157 = arith.addf %155, %156 : vector<64x128xf32>
      %c0_57 = arith.constant 0 : index
      %c0_58 = arith.constant 0 : index
      %158 = vector.load %arg19[%c0_57, %c0_58] : memref<64x128xf32, #tpu.memory_space<vmem>>, vector<64x128xf32>
      tpu.vector_store %arg19[%c0_57, %c0_58], %157 {strides = array<i32>} : memref<64x128xf32, #tpu.memory_space<vmem>>, vector<64x128xf32>,
    } else {
    }
    return
  }
  func.func @transform_0(%arg0: i32, %arg1: i32) -> (i32, i32) {
    %c0_i32 = arith.constant 0 : i32
    %c0_i32_0 = arith.constant 0 : i32
    return %arg0, %c0_i32 : i32, i32
  }
  func.func @transform_1(%arg0: i32, %arg1: i32) -> (i32, i32) {
    %c0_i32 = arith.constant 0 : i32
    %c0_i32_0 = arith.constant 0 : i32
    %c0_i32_1 = arith.constant 0 : i32
    return %c0_i32, %c0_i32_0 : i32, i32
  }
  func.func @transform_2(%arg0: i32, %arg1: i32) -> (i32, i32) {
    %c0_i32 = arith.constant 0 : i32
    %c0_i32_0 = arith.constant 0 : i32
    %c0_i32_1 = arith.constant 0 : i32
    return %c0_i32, %c0_i32_0 : i32, i32
  }
  func.func @transform_3(%arg0: i32, %arg1: i32) -> (i32, i32, i32) {
    %c0_i32 = arith.constant 0 : i32
    %c0_i32_0 = arith.constant 0 : i32
    %c0_i32_1 = arith.constant 0 : i32
    %c0_i32_2 = arith.constant 0 : i32
    return %c0_i32, %c0_i32_0, %c0_i32_1 : i32, i32, i32
  }
  func.func @transform_4(%arg0: i32, %arg1: i32) -> (i32, i32, i32) {
    %c0_i32 = arith.constant 0 : i32
    %c0_i32_0 = arith.constant 0 : i32
    %c0_i32_1 = arith.constant 0 : i32
    %c0_i32_2 = arith.constant 0 : i32
    return %c0_i32, %c0_i32_0, %c0_i32_1 : i32, i32, i32
  }
  func.func @transform_5(%arg0: i32, %arg1: i32) -> (i32, i32, i32) {
    %c0_i32 = arith.constant 0 : i32
    %c0_i32_0 = arith.constant 0 : i32
    %c0_i32_1 = arith.constant 0 : i32
    %c0_i32_2 = arith.constant 0 : i32
    return %c0_i32, %c0_i32_0, %c0_i32_1 : i32, i32, i32
  }
  func.func @transform_6(%arg0: i32, %arg1: i32) -> (i32, i32, i32) {
    %c0_i32 = arith.constant 0 : i32
    %c0_i32_0 = arith.constant 0 : i32
    %c0_i32_1 = arith.constant 0 : i32
    %c0_i32_2 = arith.constant 0 : i32
    return %c0_i32, %c0_i32_0, %c0_i32_1 : i32, i32, i32
  }
  func.func @transform_7(%arg0: i32, %arg1: i32) -> (i32, i32, i32) {
    %c0_i32 = arith.constant 0 : i32
    %c0_i32_0 = arith.constant 0 : i32
    %c0_i32_1 = arith.constant 0 : i32
    %c0_i32_2 = arith.constant 0 : i32
    return %c0_i32, %c0_i32_0, %c0_i32_1 : i32, i32, i32
  }
  func.func @transform_8(%arg0: i32, %arg1: i32) -> (i32, i32, i32) {
    %c0_i32 = arith.constant 0 : i32
    %c0_i32_0 = arith.constant 0 : i32
    %c0_i32_1 = arith.constant 0 : i32
    %c0_i32_2 = arith.constant 0 : i32
    return %c0_i32, %c0_i32_0, %c0_i32_1 : i32, i32, i32
  }
  func.func @transform_9(%arg0: i32, %arg1: i32) -> (i32, i32, i32) {
    %c0_i32 = arith.constant 0 : i32
    %c0_i32_0 = arith.constant 0 : i32
    %c0_i32_1 = arith.constant 0 : i32
    %c0_i32_2 = arith.constant 0 : i32
    return %c0_i32, %c0_i32_0, %c0_i32_1 : i32, i32, i32
  }
  func.func @transform_10(%arg0: i32, %arg1: i32) -> (i32, i32, i32) {
    %c0_i32 = arith.constant 0 : i32
    %c0_i32_0 = arith.constant 0 : i32
    %c0_i32_1 = arith.constant 0 : i32
    %c0_i32_2 = arith.constant 0 : i32
    return %c0_i32, %c0_i32_0, %c0_i32_1 : i32, i32, i32
  }
  func.func @transform_11(%arg0: i32, %arg1: i32) -> (i32, i32, i32) {
    %c0_i32 = arith.constant 0 : i32
    %c0_i32_0 = arith.constant 0 : i32
    %c0_i32_1 = arith.constant 0 : i32
    %c0_i32_2 = arith.constant 0 : i32
    return %c0_i32, %c0_i32_0, %c0_i32_1 : i32, i32, i32
  }
  func.func @transform_12(%arg0: i32, %arg1: i32) -> (i32, i32, i32) {
    %c0_i32 = arith.constant 0 : i32
    %c0_i32_0 = arith.constant 0 : i32
    %c0_i32_1 = arith.constant 0 : i32
    %c0_i32_2 = arith.constant 0 : i32
    return %c0_i32, %c0_i32_0, %c0_i32_1 : i32, i32, i32
  }
  func.func @transform_13(%arg0: i32, %arg1: i32) -> (i32, i32, i32) {
    %c0_i32 = arith.constant 0 : i32
    %c0_i32_0 = arith.constant 0 : i32
    %c0_i32_1 = arith.constant 0 : i32
    %c0_i32_2 = arith.constant 0 : i32
    return %c0_i32, %c0_i32_0, %c0_i32_1 : i32, i32, i32
  }
  func.func @transform_14(%arg0: i32, %arg1: i32) -> (i32, i32, i32) {
    %c0_i32 = arith.constant 0 : i32
    %c0_i32_0 = arith.constant 0 : i32
    %c0_i32_1 = arith.constant 0 : i32
    %c0_i32_2 = arith.constant 0 : i32
    return %c0_i32, %c0_i32_0, %c0_i32_1 : i32, i32, i32
  }
  func.func @transform_15(%arg0: i32, %arg1: i32) -> (i32, i32) {
    %c0_i32 = arith.constant 0 : i32
    %c0_i32_0 = arith.constant 0 : i32
    %c0_i32_1 = arith.constant 0 : i32
    return %c0_i32, %c0_i32_0 : i32, i32
  }
  func.func @transform_16(%arg0: i32, %arg1: i32) -> (i32, i32) {
    %c0_i32 = arith.constant 0 : i32
    %c0_i32_0 = arith.constant 0 : i32
    %c0_i32_1 = arith.constant 0 : i32
    return %c0_i32, %c0_i32_0 : i32, i32
  }
  func.func @transform_17(%arg0: i32, %arg1: i32) -> (i32, i32) {
    %c0_i32 = arith.constant 0 : i32
    %c0_i32_0 = arith.constant 0 : i32
    return %arg0, %c0_i32 : i32, i32
  }
}

</mosaic_0001>

<llo_original>
// kernel: tpu_custom_call.1
$region0: #{tpu_custom_call.1}
  #allocation0 [shape = 'u32[]', space=smem, size = 0x4, offset = 0x4, fixed_abs, tag = 'smem constant byte address 0x4 - core index']
  #allocation1 [shape = 'u32[144,128]{1,0:T(1,128)}', space=vmem, size = 0x12000, scoped, tag = 'internal scratch']
  %s0 = inlined_call_operand.vmem [shape: bf16[64,32], index: 0, kind: input, shape index: {}]
  %s1 = inlined_call_operand.vmem [shape: bf16[32,128], index: 1, kind: input, shape index: {}]
  %s2 = inlined_call_operand.vmem [shape: f32[1,128], index: 2, kind: input, shape index: {}]
  %s3 = inlined_call_operand.vmem [shape: f32[2,1,128], index: 3, kind: input, shape index: {}]
  %s4 = inlined_call_operand.vmem [shape: f32[2,1,128], index: 4, kind: input, shape index: {}]
  %s5 = inlined_call_operand.vmem [shape: bf16[2,128,32], index: 5, kind: input, shape index: {}]
  %s6 = inlined_call_operand.vmem [shape: f32[2,128,1], index: 6, kind: input, shape index: {}]
  %s7 = inlined_call_operand.vmem [shape: bf16[2,32,128], index: 7, kind: input, shape index: {}]
  %s8 = inlined_call_operand.vmem [shape: f32[2,32,1], index: 8, kind: input, shape index: {}]
  %s9 = inlined_call_operand.vmem [shape: f32[2,1,128], index: 9, kind: input, shape index: {}]
  %s10 = inlined_call_operand.vmem [shape: f32[2,1,128], index: 10, kind: input, shape index: {}]
  %s11 = inlined_call_operand.vmem [shape: bf16[2,128,64], index: 11, kind: input, shape index: {}]
  %s12 = inlined_call_operand.vmem [shape: f32[2,1,64], index: 12, kind: input, shape index: {}]
  %s13 = inlined_call_operand.vmem [shape: bf16[2,64,128], index: 13, kind: input, shape index: {}]
  %s14 = inlined_call_operand.vmem [shape: f32[2,1,128], index: 14, kind: input, shape index: {}]
  %s15 = inlined_call_operand.vmem [shape: f32[1,128], index: 15, kind: input, shape index: {}]
  %s16 = inlined_call_operand.vmem [shape: f32[1,128], index: 16, kind: input, shape index: {}]
  %s17 = inlined_call_operand.hbm [shape: f32[64,128], index: 17, kind: output, shape index: {}]
  %s18 = sld [smem:[#allocation0]]
  $region113: #{tpu_custom_call.1} parent=0
    _
  %s20 = ssub.s32 1, %s18
  %s21 = scalar_select 0, %s20, %s18
  $region1: #{tpu_custom_call.1} parent=0
    #allocation2 [shape = 'u8[32768]{0}', space=vmem, size = 0x8000, scoped, tag = 'output window, operand 0, single buffered']
    #allocation3 [shape = 's32[2]{0}', space=sflag, size = 0x8, scoped, tag = 'scoped memory for tpu_custom_call.1']
    %22 = vsyncpa [#allocation3], 0
    loop: start=0, step=1, limit=4
    $region2: #{tpu_custom_call.1} parent=1 // loop_pre_header
      _
    $region3: #{tpu_custom_call.1} parent=1 // loop_header
      %s24 = sphi 0, %s28
      %p25 = scmp.ge.s32.totalorder %s24, 4
      %s31 = sphi 0, %s43
      %s32 = sphi 0, %s39
      %s33 = sphi 0, %s31
      %s34 = sphi 0, %s32
      %s35 = sphi 0, %s33
      %s36 = sphi 0, %s34
      %s46 = sphi 0, %s48
      %s49 = sphi 0, %s46
      %s50 = sphi 0, %s49
      %s66 = sphi 0, %s50
      %s70 = sphi 0, %s70
      %s72 = sphi 0, %s70
      %s73 = sphi 0, %s72
      %s87 = sphi 0, %s73
      %s91 = sphi 0, %s91
      %s93 = sphi 0, %s91
      %s94 = sphi 0, %s93
      %s108 = sphi 0, %s94
      %s112 = sphi 0, %s112
      %s114 = sphi 0, %s112
      %s115 = sphi 0, %s114
      %s129 = sphi 0, %s115
      %s133 = sphi 0, %s133
      %s135 = sphi 0, %s133
      %s136 = sphi 0, %s135
      %s150 = sphi 0, %s136
      %s154 = sphi 0, %s154
      %s156 = sphi 0, %s154
      %s157 = sphi 0, %s156
      %s171 = sphi 0, %s157
      %s175 = sphi 0, %s175
      %s177 = sphi 0, %s175
      %s178 = sphi 0, %s177
      %s192 = sphi 0, %s178
      %s196 = sphi 0, %s196
      %s198 = sphi 0, %s196
      %s199 = sphi 0, %s198
      %s213 = sphi 0, %s199
      %s217 = sphi 0, %s217
      %s219 = sphi 0, %s217
      %s220 = sphi 0, %s219
      %s234 = sphi 0, %s220
      %s238 = sphi 0, %s238
      %s240 = sphi 0, %s238
      %s241 = sphi 0, %s240
      %s255 = sphi 0, %s241
      %s259 = sphi 0, %s259
      %s261 = sphi 0, %s259
      %s262 = sphi 0, %s261
      %s276 = sphi 0, %s262
      %s280 = sphi 0, %s280
      %s282 = sphi 0, %s280
      %s283 = sphi 0, %s282
      %s297 = sphi 0, %s283
      %s301 = sphi 0, %s301
      %s303 = sphi 0, %s301
      %s304 = sphi 0, %s303
      %s318 = sphi 0, %s304
      %s322 = sphi 0, %s322
      %s324 = sphi 0, %s322
      %s325 = sphi 0, %s324
      %s339 = sphi 0, %s325
      %s343 = sphi 0, %s343
      %s345 = sphi 0, %s343
      %s346 = sphi 0, %s345
      %s360 = sphi 0, %s346
      %s364 = sphi 0, %s364
      %s366 = sphi 0, %s364
      %s367 = sphi 0, %s366
      %s381 = sphi 0, %s367
      %s385 = sphi 0, %s385
      %s387 = sphi 0, %s385
      %s388 = sphi 0, %s387
      %s402 = sphi 0, %s388
      %s408 = sphi 0, %s410
      %s411 = sphi 0, %s408
      %s412 = sphi 0, %s411
      %s428 = sphi 0, %s412
    $region4: #{tpu_custom_call.1} parent=1 // loop_header_branch
      %27 = sbr.rel (%p25) target = $region8
    $region5: #{tpu_custom_call.1} parent=1 // loop_body
      %s29 = ssub.s32 %s24, 1
      %s30 = ssub.s32 %s24, 2
      %s37 = sadd.s32 1, %s32
      %p38 = scmp.ge.s32.totalorder %s37, 2
      %s39 = scalar_select %p38, 0, %s37
      %s40 = sadd.s32 1, %s31
      %s41 = scalar_select %p38, %s40, %s31
      %p42 = scmp.ge.s32.totalorder %s41, 1
      %s43 = scalar_select %p42, 0, %s41
      %s44 = ssub.s32 %s31, %s43
      %p45 = scmp.eq.s32.totalorder %s44, 0
      %s47 = sadd.s32 %s46, 1
      %s48 = scalar_select %p45, %s46, %s47
      %p51 = pneg %p45
      %p52 = scmp.eq.s32.totalorder %s24, 1
      %p53 = por %p51, %p52
      %p54 = scmp.ne.s32.totalorder %s46, %s49
      %p55 = scmp.eq.s32.totalorder %s24, 0
      %p56 = por %p54, %p55
      %p57 = scmp.ne.s32.totalorder %s46, %s49
      %p58 = scmp.eq.s32.totalorder %s29, 1
      %p59 = por %p57, %p58
      %p60 = scmp.ne.s32.totalorder %s49, %s50
      %p61 = scmp.eq.s32.totalorder %s29, 0
      %p62 = por %p60, %p61
      %p63 = scmp.ne.s32.totalorder %s49, %s50
      %p64 = scmp.eq.s32.totalorder %s30, 1
      %p65 = por %p63, %p64
      %p67 = scmp.ne.s32.totalorder %s50, %s66
      %p68 = scmp.eq.s32.totalorder %s30, 0
      %p69 = por %p67, %p68
      %s71 = sadd.s32 %s70, 1
      %p74 = scmp.eq.s32.totalorder %s24, 1
      %p75 = scmp.ne.s32.totalorder %s70, %s72
      %p76 = scmp.eq.s32.totalorder %s24, 0
      %p77 = por %p75, %p76
      %p78 = scmp.ne.s32.totalorder %s70, %s72
      %p79 = scmp.eq.s32.totalorder %s29, 1
      %p80 = por %p78, %p79
      %p81 = scmp.ne.s32.totalorder %s72, %s73
      %p82 = scmp.eq.s32.totalorder %s29, 0
      %p83 = por %p81, %p82
      %p84 = scmp.ne.s32.totalorder %s72, %s73
      %p85 = scmp.eq.s32.totalorder %s30, 1
      %p86 = por %p84, %p85
      %p88 = scmp.ne.s32.totalorder %s73, %s87
      %p89 = scmp.eq.s32.totalorder %s30, 0
      %p90 = por %p88, %p89
      %s92 = sadd.s32 %s91, 1
      %p95 = scmp.eq.s32.totalorder %s24, 1
      %p96 = scmp.ne.s32.totalorder %s91, %s93
      %p97 = scmp.eq.s32.totalorder %s24, 0
      %p98 = por %p96, %p97
      %p99 = scmp.ne.s32.totalorder %s91, %s93
      %p100 = scmp.eq.s32.totalorder %s29, 1
      %p101 = por %p99, %p100
      %p102 = scmp.ne.s32.totalorder %s93, %s94
      %p103 = scmp.eq.s32.totalorder %s29, 0
      %p104 = por %p102, %p103
      %p105 = scmp.ne.s32.totalorder %s93, %s94
      %p106 = scmp.eq.s32.totalorder %s30, 1
      %p107 = por %p105, %p106
      %p109 = scmp.ne.s32.totalorder %s94, %s108
      %p110 = scmp.eq.s32.totalorder %s30, 0
      %p111 = por %p109, %p110
      %s113 = sadd.s32 %s112, 1
      %p116 = scmp.eq.s32.totalorder %s24, 1
      %p117 = scmp.ne.s32.totalorder %s112, %s114
      %p118 = scmp.eq.s32.totalorder %s24, 0
      %p119 = por %p117, %p118
      %p120 = scmp.ne.s32.totalorder %s112, %s114
      %p121 = scmp.eq.s32.totalorder %s29, 1
      %p122 = por %p120, %p121
      %p123 = scmp.ne.s32.totalorder %s114, %s115
      %p124 = scmp.eq.s32.totalorder %s29, 0
      %p125 = por %p123, %p124
      %p126 = scmp.ne.s32.totalorder %s114, %s115
      %p127 = scmp.eq.s32.totalorder %s30, 1
      %p128 = por %p126, %p127
      %p130 = scmp.ne.s32.totalorder %s115, %s129
      %p131 = scmp.eq.s32.totalorder %s30, 0
      %p132 = por %p130, %p131
      %s134 = sadd.s32 %s133, 1
      %p137 = scmp.eq.s32.totalorder %s24, 1
      %p138 = scmp.ne.s32.totalorder %s133, %s135
      %p139 = scmp.eq.s32.totalorder %s24, 0
      %p140 = por %p138, %p139
      %p141 = scmp.ne.s32.totalorder %s133, %s135
      %p142 = scmp.eq.s32.totalorder %s29, 1
      %p143 = por %p141, %p142
      %p144 = scmp.ne.s32.totalorder %s135, %s136
      %p145 = scmp.eq.s32.totalorder %s29, 0
      %p146 = por %p144, %p145
      %p147 = scmp.ne.s32.totalorder %s135, %s136
      %p148 = scmp.eq.s32.totalorder %s30, 1
      %p149 = por %p147, %p148
      %p151 = scmp.ne.s32.totalorder %s136, %s150
      %p152 = scmp.eq.s32.totalorder %s30, 0
      %p153 = por %p151, %p152
      %s155 = sadd.s32 %s154, 1
      %p158 = scmp.eq.s32.totalorder %s24, 1
      %p159 = scmp.ne.s32.totalorder %s154, %s156
      %p160 = scmp.eq.s32.totalorder %s24, 0
      %p161 = por %p159, %p160
      %p162 = scmp.ne.s32.totalorder %s154, %s156
      %p163 = scmp.eq.s32.totalorder %s29, 1
      %p164 = por %p162, %p163
      %p165 = scmp.ne.s32.totalorder %s156, %s157
      %p166 = scmp.eq.s32.totalorder %s29, 0
      %p167 = por %p165, %p166
      %p168 = scmp.ne.s32.totalorder %s156, %s157
      %p169 = scmp.eq.s32.totalorder %s30, 1
      %p170 = por %p168, %p169
      %p172 = scmp.ne.s32.totalorder %s157, %s171
      %p173 = scmp.eq.s32.totalorder %s30, 0
      %p174 = por %p172, %p173
      %s176 = sadd.s32 %s175, 1
      %p179 = scmp.eq.s32.totalorder %s24, 1
      %p180 = scmp.ne.s32.totalorder %s175, %s177
      %p181 = scmp.eq.s32.totalorder %s24, 0
      %p182 = por %p180, %p181
      %p183 = scmp.ne.s32.totalorder %s175, %s177
      %p184 = scmp.eq.s32.totalorder %s29, 1
      %p185 = por %p183, %p184
      %p186 = scmp.ne.s32.totalorder %s177, %s178
      %p187 = scmp.eq.s32.totalorder %s29, 0
      %p188 = por %p186, %p187
      %p189 = scmp.ne.s32.totalorder %s177, %s178
      %p190 = scmp.eq.s32.totalorder %s30, 1
      %p191 = por %p189, %p190
      %p193 = scmp.ne.s32.totalorder %s178, %s192
      %p194 = scmp.eq.s32.totalorder %s30, 0
      %p195 = por %p193, %p194
      %s197 = sadd.s32 %s196, 1
      %p200 = scmp.eq.s32.totalorder %s24, 1
      %p201 = scmp.ne.s32.totalorder %s196, %s198
      %p202 = scmp.eq.s32.totalorder %s24, 0
      %p203 = por %p201, %p202
      %p204 = scmp.ne.s32.totalorder %s196, %s198
      %p205 = scmp.eq.s32.totalorder %s29, 1
      %p206 = por %p204, %p205
      %p207 = scmp.ne.s32.totalorder %s198, %s199
      %p208 = scmp.eq.s32.totalorder %s29, 0
      %p209 = por %p207, %p208
      %p210 = scmp.ne.s32.totalorder %s198, %s199
      %p211 = scmp.eq.s32.totalorder %s30, 1
      %p212 = por %p210, %p211
      %p214 = scmp.ne.s32.totalorder %s199, %s213
      %p215 = scmp.eq.s32.totalorder %s30, 0
      %p216 = por %p214, %p215
      %s218 = sadd.s32 %s217, 1
      %p221 = scmp.eq.s32.totalorder %s24, 1
      %p222 = scmp.ne.s32.totalorder %s217, %s219
      %p223 = scmp.eq.s32.totalorder %s24, 0
      %p224 = por %p222, %p223
      %p225 = scmp.ne.s32.totalorder %s217, %s219
      %p226 = scmp.eq.s32.totalorder %s29, 1
      %p227 = por %p225, %p226
      %p228 = scmp.ne.s32.totalorder %s219, %s220
      %p229 = scmp.eq.s32.totalorder %s29, 0
      %p230 = por %p228, %p229
      %p231 = scmp.ne.s32.totalorder %s219, %s220
      %p232 = scmp.eq.s32.totalorder %s30, 1
      %p233 = por %p231, %p232
      %p235 = scmp.ne.s32.totalorder %s220, %s234
      %p236 = scmp.eq.s32.totalorder %s30, 0
      %p237 = por %p235, %p236
      %s239 = sadd.s32 %s238, 1
      %p242 = scmp.eq.s32.totalorder %s24, 1
      %p243 = scmp.ne.s32.totalorder %s238, %s240
      %p244 = scmp.eq.s32.totalorder %s24, 0
      %p245 = por %p243, %p244
      %p246 = scmp.ne.s32.totalorder %s238, %s240
      %p247 = scmp.eq.s32.totalorder %s29, 1
      %p248 = por %p246, %p247
      %p249 = scmp.ne.s32.totalorder %s240, %s241
      %p250 = scmp.eq.s32.totalorder %s29, 0
      %p251 = por %p249, %p250
      %p252 = scmp.ne.s32.totalorder %s240, %s241
      %p253 = scmp.eq.s32.totalorder %s30, 1
      %p254 = por %p252, %p253
      %p256 = scmp.ne.s32.totalorder %s241, %s255
      %p257 = scmp.eq.s32.totalorder %s30, 0
      %p258 = por %p256, %p257
      %s260 = sadd.s32 %s259, 1
      %p263 = scmp.eq.s32.totalorder %s24, 1
      %p264 = scmp.ne.s32.totalorder %s259, %s261
      %p265 = scmp.eq.s32.totalorder %s24, 0
      %p266 = por %p264, %p265
      %p267 = scmp.ne.s32.totalorder %s259, %s261
      %p268 = scmp.eq.s32.totalorder %s29, 1
      %p269 = por %p267, %p268
      %p270 = scmp.ne.s32.totalorder %s261, %s262
      %p271 = scmp.eq.s32.totalorder %s29, 0
      %p272 = por %p270, %p271
      %p273 = scmp.ne.s32.totalorder %s261, %s262
      %p274 = scmp.eq.s32.totalorder %s30, 1
      %p275 = por %p273, %p274
      %p277 = scmp.ne.s32.totalorder %s262, %s276
      %p278 = scmp.eq.s32.totalorder %s30, 0
      %p279 = por %p277, %p278
      %s281 = sadd.s32 %s280, 1
      %p284 = scmp.eq.s32.totalorder %s24, 1
      %p285 = scmp.ne.s32.totalorder %s280, %s282
      %p286 = scmp.eq.s32.totalorder %s24, 0
      %p287 = por %p285, %p286
      %p288 = scmp.ne.s32.totalorder %s280, %s282
      %p289 = scmp.eq.s32.totalorder %s29, 1
      %p290 = por %p288, %p289
      %p291 = scmp.ne.s32.totalorder %s282, %s283
      %p292 = scmp.eq.s32.totalorder %s29, 0
      %p293 = por %p291, %p292
      %p294 = scmp.ne.s32.totalorder %s282, %s283
      %p295 = scmp.eq.s32.totalorder %s30, 1
      %p296 = por %p294, %p295
      %p298 = scmp.ne.s32.totalorder %s283, %s297
      %p299 = scmp.eq.s32.totalorder %s30, 0
      %p300 = por %p298, %p299
      %s302 = sadd.s32 %s301, 1
      %p305 = scmp.eq.s32.totalorder %s24, 1
      %p306 = scmp.ne.s32.totalorder %s301, %s303
      %p307 = scmp.eq.s32.totalorder %s24, 0
      %p308 = por %p306, %p307
      %p309 = scmp.ne.s32.totalorder %s301, %s303
      %p310 = scmp.eq.s32.totalorder %s29, 1
      %p311 = por %p309, %p310
      %p312 = scmp.ne.s32.totalorder %s303, %s304
      %p313 = scmp.eq.s32.totalorder %s29, 0
      %p314 = por %p312, %p313
      %p315 = scmp.ne.s32.totalorder %s303, %s304
      %p316 = scmp.eq.s32.totalorder %s30, 1
      %p317 = por %p315, %p316
      %p319 = scmp.ne.s32.totalorder %s304, %s318
      %p320 = scmp.eq.s32.totalorder %s30, 0
      %p321 = por %p319, %p320
      %s323 = sadd.s32 %s322, 1
      %p326 = scmp.eq.s32.totalorder %s24, 1
      %p327 = scmp.ne.s32.totalorder %s322, %s324
      %p328 = scmp.eq.s32.totalorder %s24, 0
      %p329 = por %p327, %p328
      %p330 = scmp.ne.s32.totalorder %s322, %s324
      %p331 = scmp.eq.s32.totalorder %s29, 1
      %p332 = por %p330, %p331
      %p333 = scmp.ne.s32.totalorder %s324, %s325
      %p334 = scmp.eq.s32.totalorder %s29, 0
      %p335 = por %p333, %p334
      %p336 = scmp.ne.s32.totalorder %s324, %s325
      %p337 = scmp.eq.s32.totalorder %s30, 1
      %p338 = por %p336, %p337
      %p340 = scmp.ne.s32.totalorder %s325, %s339
      %p341 = scmp.eq.s32.totalorder %s30, 0
      %p342 = por %p340, %p341
      %s344 = sadd.s32 %s343, 1
      %p347 = scmp.eq.s32.totalorder %s24, 1
      %p348 = scmp.ne.s32.totalorder %s343, %s345
      %p349 = scmp.eq.s32.totalorder %s24, 0
      %p350 = por %p348, %p349
      %p351 = scmp.ne.s32.totalorder %s343, %s345
      %p352 = scmp.eq.s32.totalorder %s29, 1
      %p353 = por %p351, %p352
      %p354 = scmp.ne.s32.totalorder %s345, %s346
      %p355 = scmp.eq.s32.totalorder %s29, 0
      %p356 = por %p354, %p355
      %p357 = scmp.ne.s32.totalorder %s345, %s346
      %p358 = scmp.eq.s32.totalorder %s30, 1
      %p359 = por %p357, %p358
      %p361 = scmp.ne.s32.totalorder %s346, %s360
      %p362 = scmp.eq.s32.totalorder %s30, 0
      %p363 = por %p361, %p362
      %s365 = sadd.s32 %s364, 1
      %p368 = scmp.eq.s32.totalorder %s24, 1
      %p369 = scmp.ne.s32.totalorder %s364, %s366
      %p370 = scmp.eq.s32.totalorder %s24, 0
      %p371 = por %p369, %p370
      %p372 = scmp.ne.s32.totalorder %s364, %s366
      %p373 = scmp.eq.s32.totalorder %s29, 1
      %p374 = por %p372, %p373
      %p375 = scmp.ne.s32.totalorder %s366, %s367
      %p376 = scmp.eq.s32.totalorder %s29, 0
      %p377 = por %p375, %p376
      %p378 = scmp.ne.s32.totalorder %s366, %s367
      %p379 = scmp.eq.s32.totalorder %s30, 1
      %p380 = por %p378, %p379
      %p382 = scmp.ne.s32.totalorder %s367, %s381
      %p383 = scmp.eq.s32.totalorder %s30, 0
      %p384 = por %p382, %p383
      %s386 = sadd.s32 %s385, 1
      %p389 = scmp.eq.s32.totalorder %s24, 1
      %p390 = scmp.ne.s32.totalorder %s385, %s387
      %p391 = scmp.eq.s32.totalorder %s24, 0
      %p392 = por %p390, %p391
      %p393 = scmp.ne.s32.totalorder %s385, %s387
      %p394 = scmp.eq.s32.totalorder %s29, 1
      %p395 = por %p393, %p394
      %p396 = scmp.ne.s32.totalorder %s387, %s388
      %p397 = scmp.eq.s32.totalorder %s29, 0
      %p398 = por %p396, %p397
      %p399 = scmp.ne.s32.totalorder %s387, %s388
      %p400 = scmp.eq.s32.totalorder %s30, 1
      %p401 = por %p399, %p400
      %p403 = scmp.ne.s32.totalorder %s388, %s402
      %p404 = scmp.eq.s32.totalorder %s30, 0
      %p405 = por %p403, %p404
      %s406 = ssub.s32 %s31, %s43
      %p407 = scmp.eq.s32.totalorder %s406, 0
      %s409 = sadd.s32 %s408, 1
      %s410 = scalar_select %p407, %s408, %s409
      %p413 = pneg %p407
      %p414 = scmp.eq.s32.totalorder %s24, 1
      %p415 = por %p413, %p414
      %p416 = scmp.ne.s32.totalorder %s408, %s411
      %p417 = scmp.eq.s32.totalorder %s24, 0
      %p418 = por %p416, %p417
      %p419 = scmp.ne.s32.totalorder %s408, %s411
      %p420 = scmp.eq.s32.totalorder %s29, 1
      %p421 = por %p419, %p420
      %p422 = scmp.ne.s32.totalorder %s411, %s412
      %p423 = scmp.eq.s32.totalorder %s29, 0
      %p424 = por %p422, %p423
      %p425 = scmp.ne.s32.totalorder %s411, %s412
      %p426 = scmp.eq.s32.totalorder %s30, 1
      %p427 = por %p425, %p426
      %p429 = scmp.ne.s32.totalorder %s412, %s428
      %p430 = scmp.eq.s32.totalorder %s30, 0
      %p431 = por %p429, %p430
      %p432 = scmp.le.s32.totalorder 1, %s24
      %p433 = scmp.lt.s32.totalorder %s24, 3
      %p434 = pnand %p432, %p433
      %p435 = pneg %p434
      // Predicated region
      $region9: #{tpu_custom_call.1} parent=5 // pred_check
        _
      $region10: #{tpu_custom_call.1} parent=5 // pred_check_branch
        %437 = sbr.rel (%p434) target = $region12
      $region11: #{tpu_custom_call.1} parent=5 // pred_region
        %s438 = ssub.s32 %s24, 1
        // Predicated region
        $region13: #{tpu_custom_call.1} parent=11 // pred_check
          %p439 = pneg %p62
        $region14: #{tpu_custom_call.1} parent=11 // pred_check_branch
          %441 = sbr.rel (%p439) target = $region16
        $region15: #{tpu_custom_call.1} parent=11 // pred_region
          %s442 = smul.u32 8, %s33
          %p443 = scmp.lt.s32.totalorder %s442, 7
          %s444 = scalar_select %p443, %s442, 7
          %s445 = smul.addr %s444, 4
          %s446 = scalar_lea.vmem %s0, %s445
          %s447 = smul.u32 8, %s33
        $region16: #{tpu_custom_call.1} parent=11 // pred_fallthru
          _
        // Predicated region
        $region17: #{tpu_custom_call.1} parent=11 // pred_check
          %p448 = pneg %p83
        $region18: #{tpu_custom_call.1} parent=11 // pred_check_branch
          %450 = sbr.rel (%p448) target = $region20
        $region19: #{tpu_custom_call.1} parent=11 // pred_region
          _
        $region20: #{tpu_custom_call.1} parent=11 // pred_fallthru
          _
        // Predicated region
        $region21: #{tpu_custom_call.1} parent=11 // pred_check
          %p451 = pneg %p104
        $region22: #{tpu_custom_call.1} parent=11 // pred_check_branch
          %453 = sbr.rel (%p451) target = $region24
        $region23: #{tpu_custom_call.1} parent=11 // pred_region
          _
        $region24: #{tpu_custom_call.1} parent=11 // pred_fallthru
          _
        // Predicated region
        $region25: #{tpu_custom_call.1} parent=11 // pred_check
          %p454 = pneg %p125
        $region26: #{tpu_custom_call.1} parent=11 // pred_check_branch
          %456 = sbr.rel (%p454) target = $region28
        $region27: #{tpu_custom_call.1} parent=11 // pred_region
          _
        $region28: #{tpu_custom_call.1} parent=11 // pred_fallthru
          _
        // Predicated region
        $region29: #{tpu_custom_call.1} parent=11 // pred_check
          %p457 = pneg %p146
        $region30: #{tpu_custom_call.1} parent=11 // pred_check_branch
          %459 = sbr.rel (%p457) target = $region32
        $region31: #{tpu_custom_call.1} parent=11 // pred_region
          _
        $region32: #{tpu_custom_call.1} parent=11 // pred_fallthru
          _
        // Predicated region
        $region33: #{tpu_custom_call.1} parent=11 // pred_check
          %p460 = pneg %p167
        $region34: #{tpu_custom_call.1} parent=11 // pred_check_branch
          %462 = sbr.rel (%p460) target = $region36
        $region35: #{tpu_custom_call.1} parent=11 // pred_region
          _
        $region36: #{tpu_custom_call.1} parent=11 // pred_fallthru
          _
        // Predicated region
        $region37: #{tpu_custom_call.1} parent=11 // pred_check
          %p463 = pneg %p188
        $region38: #{tpu_custom_call.1} parent=11 // pred_check_branch
          %465 = sbr.rel (%p463) target = $region40
        $region39: #{tpu_custom_call.1} parent=11 // pred_region
          _
        $region40: #{tpu_custom_call.1} parent=11 // pred_fallthru
          _
        // Predicated region
        $region41: #{tpu_custom_call.1} parent=11 // pred_check
          %p466 = pneg %p209
        $region42: #{tpu_custom_call.1} parent=11 // pred_check_branch
          %468 = sbr.rel (%p466) target = $region44
        $region43: #{tpu_custom_call.1} parent=11 // pred_region
          _
        $region44: #{tpu_custom_call.1} parent=11 // pred_fallthru
          _
        // Predicated region
        $region45: #{tpu_custom_call.1} parent=11 // pred_check
          %p469 = pneg %p230
        $region46: #{tpu_custom_call.1} parent=11 // pred_check_branch
          %471 = sbr.rel (%p469) target = $region48
        $region47: #{tpu_custom_call.1} parent=11 // pred_region
          _
        $region48: #{tpu_custom_call.1} parent=11 // pred_fallthru
          _
        // Predicated region
        $region49: #{tpu_custom_call.1} parent=11 // pred_check
          %p472 = pneg %p251
        $region50: #{tpu_custom_call.1} parent=11 // pred_check_branch
          %474 = sbr.rel (%p472) target = $region52
        $region51: #{tpu_custom_call.1} parent=11 // pred_region
          _
        $region52: #{tpu_custom_call.1} parent=11 // pred_fallthru
          _
        // Predicated region
        $region53: #{tpu_custom_call.1} parent=11 // pred_check
          %p475 = pneg %p272
        $region54: #{tpu_custom_call.1} parent=11 // pred_check_branch
          %477 = sbr.rel (%p475) target = $region56
        $region55: #{tpu_custom_call.1} parent=11 // pred_region
          _
        $region56: #{tpu_custom_call.1} parent=11 // pred_fallthru
          _
        // Predicated region
        $region57: #{tpu_custom_call.1} parent=11 // pred_check
          %p478 = pneg %p293
        $region58: #{tpu_custom_call.1} parent=11 // pred_check_branch
          %480 = sbr.rel (%p478) target = $region60
        $region59: #{tpu_custom_call.1} parent=11 // pred_region
          _
        $region60: #{tpu_custom_call.1} parent=11 // pred_fallthru
          _
        // Predicated region
        $region61: #{tpu_custom_call.1} parent=11 // pred_check
          %p481 = pneg %p314
        $region62: #{tpu_custom_call.1} parent=11 // pred_check_branch
          %483 = sbr.rel (%p481) target = $region64
        $region63: #{tpu_custom_call.1} parent=11 // pred_region
          _
        $region64: #{tpu_custom_call.1} parent=11 // pred_fallthru
          _
        // Predicated region
        $region65: #{tpu_custom_call.1} parent=11 // pred_check
          %p484 = pneg %p335
        $region66: #{tpu_custom_call.1} parent=11 // pred_check_branch
          %486 = sbr.rel (%p484) target = $region68
        $region67: #{tpu_custom_call.1} parent=11 // pred_region
          _
        $region68: #{tpu_custom_call.1} parent=11 // pred_fallthru
          _
        // Predicated region
        $region69: #{tpu_custom_call.1} parent=11 // pred_check
          %p487 = pneg %p356
        $region70: #{tpu_custom_call.1} parent=11 // pred_check_branch
          %489 = sbr.rel (%p487) target = $region72
        $region71: #{tpu_custom_call.1} parent=11 // pred_region
          _
        $region72: #{tpu_custom_call.1} parent=11 // pred_fallthru
          _
        // Predicated region
        $region73: #{tpu_custom_call.1} parent=11 // pred_check
          %p490 = pneg %p377
        $region74: #{tpu_custom_call.1} parent=11 // pred_check_branch
          %492 = sbr.rel (%p490) target = $region76
        $region75: #{tpu_custom_call.1} parent=11 // pred_region
          _
        $region76: #{tpu_custom_call.1} parent=11 // pred_fallthru
          _
        // Predicated region
        $region77: #{tpu_custom_call.1} parent=11 // pred_check
          %p493 = pneg %p398
        $region78: #{tpu_custom_call.1} parent=11 // pred_check_branch
          %495 = sbr.rel (%p493) target = $region80
        $region79: #{tpu_custom_call.1} parent=11 // pred_region
          _
        $region80: #{tpu_custom_call.1} parent=11 // pred_fallthru
          _
      $region12: #{tpu_custom_call.1} parent=5 // pred_fallthru
        _
      %p496 = scmp.lt.s32.totalorder %s24, 2
      // Predicated region
      $region81: #{tpu_custom_call.1} parent=5 // pred_check
        %p497 = pneg %p496
      $region82: #{tpu_custom_call.1} parent=5 // pred_check_branch
        %499 = sbr.rel (%p497) target = $region84
      $region83: #{tpu_custom_call.1} parent=5 // pred_region
        _
      $region84: #{tpu_custom_call.1} parent=5 // pred_fallthru
        _
      %p500 = scmp.le.s32.totalorder 1, %s24
      %p501 = scmp.lt.s32.totalorder %s24, 3
      %p502 = pnand %p500, %p501
      %p503 = pneg %p502
      // Predicated region
      $region85: #{tpu_custom_call.1} parent=5 // pred_check
        _
      $region86: #{tpu_custom_call.1} parent=5 // pred_check_branch
        %505 = sbr.rel (%p502) target = $region88
      $region87: #{tpu_custom_call.1} parent=5 // pred_region
        %s506 = ssub.s32 %s24, 1
        %s507 = smul.u32 8, %s33
        %p508 = scmp.lt.s32.totalorder %s507, 7
        %s509 = scalar_select %p508, %s507, 7
        %s510 = smul.addr %s509, 4
        %s511 = scalar_lea.vmem %s0, %s510
        %p512 = pneg %p62
        %p513 = pneg %p59
        %p514 = pneg %p83
        %p515 = pneg %p80
        %p516 = pneg %p104
        %p517 = pneg %p101
        %p518 = pneg %p125
        %p519 = pneg %p122
        %p520 = pneg %p146
        %p521 = pneg %p143
        %p522 = pneg %p167
        %p523 = pneg %p164
        %p524 = pneg %p188
        %p525 = pneg %p185
        %p526 = pneg %p209
        %p527 = pneg %p206
        %p528 = pneg %p230
        %p529 = pneg %p227
        %p530 = pneg %p251
        %p531 = pneg %p248
        %p532 = pneg %p272
        %p533 = pneg %p269
        %p534 = pneg %p293
        %p535 = pneg %p290
        %p536 = pneg %p314
        %p537 = pneg %p311
        %p538 = pneg %p335
        %p539 = pneg %p332
        %p540 = pneg %p356
        %p541 = pneg %p353
        %p542 = pneg %p377
        %p543 = pneg %p374
        %p544 = pneg %p398
        %p545 = pneg %p395
        %p546 = pneg %p424
        %p547 = pneg %p421
        %s548 = smul.u32 8, %s33
        %p549 = scmp.lt.s32.totalorder %s548, 7
        %s550 = scalar_select %p549, %s548, 7
        %s551 = smul.addr %s550, 4
        %s552 = scalar_lea.vmem %s0, %s551
        %s553 = smul.u32 8, %s33
        %s554 = smul.u32 8, %s33
        %p556 = scmp.eq.s32.totalorder %s34, 0
        // Predicated region
        $region89: #{tpu_custom_call.1} parent=87 // pred_check
          %p557 = pneg %p556
        $region90: #{tpu_custom_call.1} parent=87 // pred_check_branch
          %559 = sbr.rel (%p557) target = $region92
        $region91: #{tpu_custom_call.1} parent=87 // pred_region
          %v560 = vld [vmem:[%s552] sm:$0xf]
          %v561 = vld [vmem:[%s552 + $0x4] sm:$0xf]
          %v562 = vld [vmem:[%s552 + $0x8] sm:$0xf]
          %v563 = vld [vmem:[%s552 + $0xc] sm:$0xf]
          %v564 = vld [vmem:[%s552 + $0x10] sm:$0xf]
          %v565 = vld [vmem:[%s552 + $0x14] sm:$0xf]
          %v566 = vld [vmem:[%s552 + $0x18] sm:$0xf]
          %v567 = vld [vmem:[%s552 + $0x1c] sm:$0xf]
          %v568 = vld [vmem:[%s1] sm:$0xf]
          %v569 = vld [vmem:[%s1 + $0x4] sm:$0xf]
          %v570 = vld [vmem:[%s1 + $0x8] sm:$0xf]
          %v571 = vld [vmem:[%s1 + $0xc] sm:$0xf]
          %v572 = vld [vmem:[%s2] sm:$0x1]
          %v574 = vlaneseq
          %v575 = vshrl.u32 %v574, 7
          %v576 = vsub.s32 0, %v575
          %v577 = vrot.slane %v572, %v576
          %v587 = vunpack.c.l.b16 %v560
          %v588 = vunpack.c.l.b16 %v561
          %v589 = vunpack.c.l.b16 %v562
          %v590 = vunpack.c.l.b16 %v563
          %v591 = vunpack.c.l.b16 %v564
          %v592 = vunpack.c.l.b16 %v565
          %v593 = vunpack.c.l.b16 %v566
          %v594 = vunpack.c.l.b16 %v567
          %v595 = vpack.c.b16 %v588, %v587
          %v596 = vpack.c.b16 %v590, %v589
          %v597 = vpack.c.b16 %v592, %v591
          %v598 = vpack.c.b16 %v594, %v593
          %v603 = vunpack.c.l.b16 %v568
          %v604 = vunpack.c.l.b16 %v569
          %v605 = vunpack.c.l.b16 %v570
          %v606 = vunpack.c.l.b16 %v571
          %v607 = vpack.c.b16 %v604, %v603
          %v608 = vpack.c.b16 %v606, %v605
          %vm611 = vcmask 261120
          %v613 = vsel %vm611, %v595, 0
          %v616 = vsel %vm611, %v596, 0
          %v619 = vsel %vm611, %v597, 0
          %v622 = vsel %vm611, %v598, 0
          %624 = vmatprep.subr.bf16.mxu0 0
          %625 = vmatpush1.bf16.msra.mxu0 0
          %626 = vmatprep.subr.bf16.mxu0 0
          %627 = vmatpush1.bf16.msra.mxu0 0
          %628 = vmatprep.subr.bf16.mxu0 0
          %629 = vmatpush1.bf16.msra.mxu0 0
          %630 = vmatprep.subr.bf16.mxu0 0
          %631 = vmatpush1.bf16.msra.mxu0 0
          %632 = vmatprep.subr.bf16.mxu0 0
          %633 = vmatpush1.bf16.msra.mxu0 0
          %634 = vmatprep.subr.bf16.mxu0 0
          %635 = vmatpush1.bf16.msra.mxu0 0
          %636 = vmatprep.subr.bf16.mxu0 0
          %637 = vmatpush1.bf16.msra.mxu0 %v608
          %638 = vmatprep.subr.bf16.mxu0 0
          %639 = vmatpush1.bf16.msra.mxu0 %v607
          %640 = vmatprep.subr.bf16.mxu0 0
          %641 = vmatpush2.bf16.msra.mxu0 0
          %642 = vmatprep.subr.bf16.mxu0 0
          %643 = vmatpush2.bf16.msra.mxu0 0
          %644 = vmatprep.subr.bf16.mxu0 0
          %645 = vmatpush2.bf16.msra.mxu0 0
          %646 = vmatprep.subr.bf16.mxu0 0
          %647 = vmatpush2.bf16.msra.mxu0 0
          %648 = vmatprep.subr.bf16.mxu0 0
          %649 = vmatpush2.bf16.msra.mxu0 0
          %650 = vmatprep.subr.bf16.mxu0 0
          %651 = vmatpush2.bf16.msra.mxu0 0
          %652 = vmatprep.subr.bf16.mxu0 0
          %653 = vmatpush2.bf16.msra.mxu0 0
          %654 = vmatprep.subr.bf16.mxu0 0
          %655 = vmatpush2.bf16.msra.mxu0 0
          %656 = vmatprep.mubr.bf16.mxu0 0
          %657 = vmatmul.mubr.bf16.gmra.mxu0 %v613
          %v658 = vpop.f32.mrf.mxu0
          %v659 = vadd.f32 %v577, %v658
          %v660 = vpop.f32.mrf.mxu0
          %v661 = vpop.f32.mrf.mxu0
          %v662 = vadd.f32 %v577, %v661
          %v663 = vpop.f32.mrf.mxu0
          %664 = vmatprep.mubr.bf16.mxu0 0
          %665 = vmatmul.mubr.bf16.gmra.mxu0 %v616
          %v666 = vpop.f32.mrf.mxu0
          %v667 = vadd.f32 %v577, %v666
          %v668 = vpop.f32.mrf.mxu0
          %v669 = vpop.f32.mrf.mxu0
          %v670 = vadd.f32 %v577, %v669
          %v671 = vpop.f32.mrf.mxu0
          %672 = vmatprep.mubr.bf16.mxu0 0
          %673 = vmatmul.mubr.bf16.gmra.mxu0 %v619
          %v674 = vpop.f32.mrf.mxu0
          %v675 = vadd.f32 %v577, %v674
          %v676 = vpop.f32.mrf.mxu0
          %v677 = vpop.f32.mrf.mxu0
          %v678 = vadd.f32 %v577, %v677
          %v679 = vpop.f32.mrf.mxu0
          %680 = vmatprep.mubr.bf16.mxu0 0
          %681 = vmatmul.mubr.bf16.gmra.mxu0 %v622
          %v682 = vpop.f32.mrf.mxu0
          %v683 = vadd.f32 %v577, %v682
          %v684 = vpop.f32.mrf.mxu0
          %v685 = vpop.f32.mrf.mxu0
          %v686 = vadd.f32 %v577, %v685
          %v687 = vpop.f32.mrf.mxu0
          %688 = vdwg.mxu0
          %689 = vst [vmem:[#allocation2] sm:$0xff] %v659
          %690 = vst [vmem:[#allocation2 + $0x8] sm:$0xff] %v662
          %691 = vst [vmem:[#allocation2 + $0x10] sm:$0xff] %v667
          %692 = vst [vmem:[#allocation2 + $0x18] sm:$0xff] %v670
          %693 = vst [vmem:[#allocation2 + $0x20] sm:$0xff] %v675
          %694 = vst [vmem:[#allocation2 + $0x28] sm:$0xff] %v678
          %695 = vst [vmem:[#allocation2 + $0x30] sm:$0xff] %v683
          %696 = vst [vmem:[#allocation2 + $0x38] sm:$0xff] %v686
        $region92: #{tpu_custom_call.1} parent=87 // pred_fallthru
          _
        %v697 = vld [vmem:[#allocation2] sm:$0xff]
        %v698 = vld [vmem:[#allocation2 + $0x8] sm:$0xff]
        %v699 = vld [vmem:[#allocation2 + $0x10] sm:$0xff]
        %v700 = vld [vmem:[#allocation2 + $0x18] sm:$0xff]
        %v701 = vld [vmem:[#allocation2 + $0x20] sm:$0xff]
        %v702 = vld [vmem:[#allocation2 + $0x28] sm:$0xff]
        %v703 = vld [vmem:[#allocation2 + $0x30] sm:$0xff]
        %v704 = vld [vmem:[#allocation2 + $0x38] sm:$0xff]
        %s705 = scalar_lea.vmem %s3, %s34
        %v706 = vld [vmem:[%s705] sm:$0x1]
        %s707 = scalar_lea.vmem %s4, %s34
        %v708 = vld [vmem:[%s707] sm:$0x1]
        %709 = vadd.xlane.f32.xlu0 %v697
        %v710 = vpop.xlane.xlu0 %709
        %711 = vadd.xlane.f32.xlu0 %v698
        %v712 = vpop.xlane.xlu0 %711
        %713 = vadd.xlane.f32.xlu0 %v699
        %v714 = vpop.xlane.xlu0 %713
        %715 = vadd.xlane.f32.xlu0 %v700
        %v716 = vpop.xlane.xlu0 %715
        %717 = vadd.xlane.f32.xlu0 %v701
        %v718 = vpop.xlane.xlu0 %717
        %719 = vadd.xlane.f32.xlu0 %v702
        %v720 = vpop.xlane.xlu0 %719
        %721 = vadd.xlane.f32.xlu0 %v703
        %v722 = vpop.xlane.xlu0 %721
        %723 = vadd.xlane.f32.xlu0 %v704
        %v724 = vpop.xlane.xlu0 %723
        %v725 = vrcp.pop 128.0
        %v726 = vmul.f32 %v710, %v725
        %v727 = vmul.f32 %v712, %v725
        %v728 = vmul.f32 %v714, %v725
        %v729 = vmul.f32 %v716, %v725
        %v730 = vmul.f32 %v718, %v725
        %v731 = vmul.f32 %v720, %v725
        %v732 = vmul.f32 %v722, %v725
        %v733 = vmul.f32 %v724, %v725
        %v734 = vsub.f32 %v697, %v726
        %v735 = vsub.f32 %v698, %v727
        %v736 = vsub.f32 %v699, %v728
        %v737 = vsub.f32 %v700, %v729
        %v738 = vsub.f32 %v701, %v730
        %v739 = vsub.f32 %v702, %v731
        %v740 = vsub.f32 %v703, %v732
        %v741 = vsub.f32 %v704, %v733
        %v742 = vmul.f32 %v734, %v734
        %v743 = vmul.f32 %v735, %v735
        %v744 = vmul.f32 %v736, %v736
        %v745 = vmul.f32 %v737, %v737
        %v746 = vmul.f32 %v738, %v738
        %v747 = vmul.f32 %v739, %v739
        %v748 = vmul.f32 %v740, %v740
        %v749 = vmul.f32 %v741, %v741
        %750 = vadd.xlane.f32.xlu0 %v742
        %v751 = vpop.xlane.xlu0 %750
        %752 = vadd.xlane.f32.xlu0 %v743
        %v753 = vpop.xlane.xlu0 %752
        %754 = vadd.xlane.f32.xlu0 %v744
        %v755 = vpop.xlane.xlu0 %754
        %756 = vadd.xlane.f32.xlu0 %v745
        %v757 = vpop.xlane.xlu0 %756
        %758 = vadd.xlane.f32.xlu0 %v746
        %v759 = vpop.xlane.xlu0 %758
        %760 = vadd.xlane.f32.xlu0 %v747
        %v761 = vpop.xlane.xlu0 %760
        %762 = vadd.xlane.f32.xlu0 %v748
        %v763 = vpop.xlane.xlu0 %762
        %764 = vadd.xlane.f32.xlu0 %v749
        %v765 = vpop.xlane.xlu0 %764
        %v766 = vmul.f32 %v751, %v725
        %v767 = vmul.f32 %v753, %v725
        %v768 = vmul.f32 %v755, %v725
        %v769 = vmul.f32 %v757, %v725
        %v770 = vmul.f32 %v759, %v725
        %v771 = vmul.f32 %v761, %v725
        %v772 = vmul.f32 %v763, %v725
        %v773 = vmul.f32 %v765, %v725
        %v774 = vadd.f32 %v766, 1e-05
        %v775 = vadd.f32 %v767, 1e-05
        %v776 = vadd.f32 %v768, 1e-05
        %v777 = vadd.f32 %v769, 1e-05
        %v778 = vadd.f32 %v770, 1e-05
        %v779 = vadd.f32 %v771, 1e-05
        %v780 = vadd.f32 %v772, 1e-05
        %v781 = vadd.f32 %v773, 1e-05
        %v782 = vrsqrt.pop %v774
        %v783 = vrsqrt.pop %v775
        %v784 = vrsqrt.pop %v776
        %v785 = vrsqrt.pop %v777
        %v786 = vrsqrt.pop %v778
        %v787 = vrsqrt.pop %v779
        %v788 = vrsqrt.pop %v780
        %v789 = vrsqrt.pop %v781
        %v790 = vmul.f32 %v734, %v782
        %v791 = vmul.f32 %v735, %v783
        %v792 = vmul.f32 %v736, %v784
        %v793 = vmul.f32 %v737, %v785
        %v794 = vmul.f32 %v738, %v786
        %v795 = vmul.f32 %v739, %v787
        %v796 = vmul.f32 %v740, %v788
        %v797 = vmul.f32 %v741, %v789
        %v799 = vlaneseq
        %v800 = vshrl.u32 %v799, 7
        %v801 = vsub.s32 0, %v800
        %v802 = vrot.slane %v706, %v801
        %v804 = vmul.f32 %v790, %v802
        %v805 = vmul.f32 %v791, %v802
        %v806 = vmul.f32 %v792, %v802
        %v807 = vmul.f32 %v793, %v802
        %v808 = vmul.f32 %v794, %v802
        %v809 = vmul.f32 %v795, %v802
        %v810 = vmul.f32 %v796, %v802
        %v811 = vmul.f32 %v797, %v802
        %v813 = vlaneseq
        %v814 = vshrl.u32 %v813, 7
        %v815 = vsub.s32 0, %v814
        %v816 = vrot.slane %v708, %v815
        %v818 = vadd.f32 %v804, %v816
        %v819 = vadd.f32 %v805, %v816
        %v820 = vadd.f32 %v806, %v816
        %v821 = vadd.f32 %v807, %v816
        %v822 = vadd.f32 %v808, %v816
        %v823 = vadd.f32 %v809, %v816
        %v824 = vadd.f32 %v810, %v816
        %v825 = vadd.f32 %v811, %v816
        %v826 = vpack.c.bf16 %v819, %v818
        %v827 = vpack.c.bf16 %v821, %v820
        %v828 = vpack.c.bf16 %v823, %v822
        %v829 = vpack.c.bf16 %v825, %v824
        %s830 = smul.u32 %s34, 16
        %s831 = smul.addr %s830, 4
        %s832 = scalar_lea.vmem %s5, %s831
        %v833 = vld [vmem:[%s832] sm:$0xf]
        %v834 = vld [vmem:[%s832 + $0x4] sm:$0xf]
        %v835 = vld [vmem:[%s832 + $0x8] sm:$0xf]
        %v836 = vld [vmem:[%s832 + $0xc] sm:$0xf]
        %v837 = vld [vmem:[%s832 + $0x10] sm:$0xf]
        %v838 = vld [vmem:[%s832 + $0x14] sm:$0xf]
        %v839 = vld [vmem:[%s832 + $0x18] sm:$0xf]
        %v840 = vld [vmem:[%s832 + $0x1c] sm:$0xf]
        %v841 = vld [vmem:[%s832 + $0x20] sm:$0xf]
        %v842 = vld [vmem:[%s832 + $0x24] sm:$0xf]
        %v843 = vld [vmem:[%s832 + $0x28] sm:$0xf]
        %v844 = vld [vmem:[%s832 + $0x2c] sm:$0xf]
        %v845 = vld [vmem:[%s832 + $0x30] sm:$0xf]
        %v846 = vld [vmem:[%s832 + $0x34] sm:$0xf]
        %v847 = vld [vmem:[%s832 + $0x38] sm:$0xf]
        %v848 = vld [vmem:[%s832 + $0x3c] sm:$0xf]
        %s849 = smul.u32 %s34, 4
        %s850 = smul.addr %s849, 4
        %s851 = scalar_lea.vmem %s7, %s850
        %v852 = vld [vmem:[%s851] sm:$0xf]
        %v853 = vld [vmem:[%s851 + $0x4] sm:$0xf]
        %v854 = vld [vmem:[%s851 + $0x8] sm:$0xf]
        %v855 = vld [vmem:[%s851 + $0xc] sm:$0xf]
        %s856 = smul.u32 %s34, 128
        %s857 = scalar_lea.vmem %s6, %s856
        %v858 = vld [vmem:[%s857] sm:$0xff]
        %v859 = vld [vmem:[%s857 + $0x8] sm:$0xff]
        %v860 = vld [vmem:[%s857 + $0x10] sm:$0xff]
        %v861 = vld [vmem:[%s857 + $0x18] sm:$0xff]
        %v862 = vld [vmem:[%s857 + $0x20] sm:$0xff]
        %v863 = vld [vmem:[%s857 + $0x28] sm:$0xff]
        %v864 = vld [vmem:[%s857 + $0x30] sm:$0xff]
        %v865 = vld [vmem:[%s857 + $0x38] sm:$0xff]
        %v866 = vld [vmem:[%s857 + $0x40] sm:$0xff]
        %v867 = vld [vmem:[%s857 + $0x48] sm:$0xff]
        %v868 = vld [vmem:[%s857 + $0x50] sm:$0xff]
        %v869 = vld [vmem:[%s857 + $0x58] sm:$0xff]
        %v870 = vld [vmem:[%s857 + $0x60] sm:$0xff]
        %v871 = vld [vmem:[%s857 + $0x68] sm:$0xff]
        %v872 = vld [vmem:[%s857 + $0x70] sm:$0xff]
        %v873 = vld [vmem:[%s857 + $0x78] sm:$0xff]
        %875 = vset.pattern.permute.xlu0 0
        %876 = vperm.xlu0 %875, %v858
        %v877 = vpop.permute.xlu0 %876
        %880 = vset.pattern.permute.xlu0 0
        %881 = vperm.xlu0 %880, %v859
        %v882 = vpop.permute.xlu0 %881
        %885 = vset.pattern.permute.xlu0 0
        %886 = vperm.xlu0 %885, %v860
        %v887 = vpop.permute.xlu0 %886
        %890 = vset.pattern.permute.xlu0 0
        %891 = vperm.xlu0 %890, %v861
        %v892 = vpop.permute.xlu0 %891
        %895 = vset.pattern.permute.xlu0 0
        %896 = vperm.xlu0 %895, %v862
        %v897 = vpop.permute.xlu0 %896
        %900 = vset.pattern.permute.xlu0 0
        %901 = vperm.xlu0 %900, %v863
        %v902 = vpop.permute.xlu0 %901
        %905 = vset.pattern.permute.xlu0 0
        %906 = vperm.xlu0 %905, %v864
        %v907 = vpop.permute.xlu0 %906
        %910 = vset.pattern.permute.xlu0 0
        %911 = vperm.xlu0 %910, %v865
        %v912 = vpop.permute.xlu0 %911
        %915 = vset.pattern.permute.xlu0 0
        %916 = vperm.xlu0 %915, %v866
        %v917 = vpop.permute.xlu0 %916
        %920 = vset.pattern.permute.xlu0 0
        %921 = vperm.xlu0 %920, %v867
        %v922 = vpop.permute.xlu0 %921
        %925 = vset.pattern.permute.xlu0 0
        %926 = vperm.xlu0 %925, %v868
        %v927 = vpop.permute.xlu0 %926
        %930 = vset.pattern.permute.xlu0 0
        %931 = vperm.xlu0 %930, %v869
        %v932 = vpop.permute.xlu0 %931
        %935 = vset.pattern.permute.xlu0 0
        %936 = vperm.xlu0 %935, %v870
        %v937 = vpop.permute.xlu0 %936
        %940 = vset.pattern.permute.xlu0 0
        %941 = vperm.xlu0 %940, %v871
        %v942 = vpop.permute.xlu0 %941
        %945 = vset.pattern.permute.xlu0 0
        %946 = vperm.xlu0 %945, %v872
        %v947 = vpop.permute.xlu0 %946
        %950 = vset.pattern.permute.xlu0 0
        %951 = vperm.xlu0 %950, %v873
        %v952 = vpop.permute.xlu0 %951
        %v970 = vunpack.c.l.b16 %v833
        %v971 = vunpack.c.l.b16 %v834
        %v972 = vunpack.c.l.b16 %v835
        %v973 = vunpack.c.l.b16 %v836
        %v974 = vunpack.c.l.b16 %v837
        %v975 = vunpack.c.l.b16 %v838
        %v976 = vunpack.c.l.b16 %v839
        %v977 = vunpack.c.l.b16 %v840
        %v978 = vunpack.c.l.b16 %v841
        %v979 = vunpack.c.l.b16 %v842
        %v980 = vunpack.c.l.b16 %v843
        %v981 = vunpack.c.l.b16 %v844
        %v982 = vunpack.c.l.b16 %v845
        %v983 = vunpack.c.l.b16 %v846
        %v984 = vunpack.c.l.b16 %v847
        %v985 = vunpack.c.l.b16 %v848
        %v986 = vpack.c.b16 %v971, %v970
        %v987 = vpack.c.b16 %v973, %v972
        %v988 = vpack.c.b16 %v975, %v974
        %v989 = vpack.c.b16 %v977, %v976
        %v990 = vpack.c.b16 %v979, %v978
        %v991 = vpack.c.b16 %v981, %v980
        %v992 = vpack.c.b16 %v983, %v982
        %v993 = vpack.c.b16 %v985, %v984
        %vm994 = vcmask 261120
        %v996 = vsel %vm994, %v986, 0
        %v999 = vsel %vm994, %v987, 0
        %v1002 = vsel %vm994, %v988, 0
        %v1005 = vsel %vm994, %v989, 0
        %v1008 = vsel %vm994, %v990, 0
        %v1011 = vsel %vm994, %v991, 0
        %v1014 = vsel %vm994, %v992, 0
        %v1017 = vsel %vm994, %v993, 0
        %1019 = vmatprep.subr.bf16.mxu0 0
        %1020 = vmatpush1.bf16.msra.mxu0 0
        %1021 = vmatprep.subr.bf16.mxu0 0
        %1022 = vmatpush1.bf16.msra.mxu0 0
        %1023 = vmatprep.subr.bf16.mxu0 0
        %1024 = vmatpush1.bf16.msra.mxu0 0
        %1025 = vmatprep.subr.bf16.mxu0 0
        %1026 = vmatpush1.bf16.msra.mxu0 0
        %1027 = vmatprep.subr.bf16.mxu0 0
        %1028 = vmatpush1.bf16.msra.mxu0 0
        %1029 = vmatprep.subr.bf16.mxu0 0
        %1030 = vmatpush1.bf16.msra.mxu0 0
        %1031 = vmatprep.subr.bf16.mxu0 0
        %1032 = vmatpush1.bf16.msra.mxu0 %v827
        %1033 = vmatprep.subr.bf16.mxu0 0
        %1034 = vmatpush1.bf16.msra.mxu0 %v826
        %1035 = vmatprep.subr.bf16.mxu0 0
        %1036 = vmatpush2.bf16.msra.mxu0 0
        %1037 = vmatprep.subr.bf16.mxu0 0
        %1038 = vmatpush2.bf16.msra.mxu0 0
        %1039 = vmatprep.subr.bf16.mxu0 0
        %1040 = vmatpush2.bf16.msra.mxu0 0
        %1041 = vmatprep.subr.bf16.mxu0 0
        %1042 = vmatpush2.bf16.msra.mxu0 0
        %1043 = vmatprep.subr.bf16.mxu0 0
        %1044 = vmatpush2.bf16.msra.mxu0 0
        %1045 = vmatprep.subr.bf16.mxu0 0
        %1046 = vmatpush2.bf16.msra.mxu0 0
        %1047 = vmatprep.subr.bf16.mxu0 0
        %1048 = vmatpush2.bf16.msra.mxu0 0
        %1049 = vmatprep.subr.bf16.mxu0 0
        %1050 = vmatpush2.bf16.msra.mxu0 0
        %1051 = vmatprep.mubr.bf16.mxu0 0
        %1052 = vmatmul.mubr.bf16.gmra.mxu0 %v996
        %v1053 = vpop.f32.mrf.mxu0
        %v1054 = vadd.f32 %v877, %v1053
        %v1055 = vpop.f32.mrf.mxu0
        %v1056 = vpop.f32.mrf.mxu0
        %v1057 = vadd.f32 %v882, %v1056
        %v1058 = vpop.f32.mrf.mxu0
        %1059 = vmatprep.mubr.bf16.mxu0 0
        %1060 = vmatmul.mubr.bf16.gmra.mxu0 %v999
        %v1061 = vpop.f32.mrf.mxu0
        %v1062 = vadd.f32 %v887, %v1061
        %v1063 = vpop.f32.mrf.mxu0
        %v1064 = vpop.f32.mrf.mxu0
        %v1065 = vadd.f32 %v892, %v1064
        %v1066 = vpop.f32.mrf.mxu0
        %1067 = vmatprep.mubr.bf16.mxu0 0
        %1068 = vmatmul.mubr.bf16.gmra.mxu0 %v1002
        %v1069 = vpop.f32.mrf.mxu0
        %v1070 = vadd.f32 %v897, %v1069
        %v1071 = vpop.f32.mrf.mxu0
        %v1072 = vpop.f32.mrf.mxu0
        %v1073 = vadd.f32 %v902, %v1072
        %v1074 = vpop.f32.mrf.mxu0
        %1075 = vmatprep.mubr.bf16.mxu0 0
        %1076 = vmatmul.mubr.bf16.gmra.mxu0 %v1005
        %v1077 = vpop.f32.mrf.mxu0
        %v1078 = vadd.f32 %v907, %v1077
        %v1079 = vpop.f32.mrf.mxu0
        %v1080 = vpop.f32.mrf.mxu0
        %v1081 = vadd.f32 %v912, %v1080
        %v1082 = vpop.f32.mrf.mxu0
        %1083 = vmatprep.mubr.bf16.mxu0 0
        %1084 = vmatmul.mubr.bf16.gmra.mxu0 %v1008
        %v1085 = vpop.f32.mrf.mxu0
        %v1086 = vadd.f32 %v917, %v1085
        %v1087 = vpop.f32.mrf.mxu0
        %v1088 = vpop.f32.mrf.mxu0
        %v1089 = vadd.f32 %v922, %v1088
        %v1090 = vpop.f32.mrf.mxu0
        %1091 = vmatprep.mubr.bf16.mxu0 0
        %1092 = vmatmul.mubr.bf16.gmra.mxu0 %v1011
        %v1093 = vpop.f32.mrf.mxu0
        %v1094 = vadd.f32 %v927, %v1093
        %v1095 = vpop.f32.mrf.mxu0
        %v1096 = vpop.f32.mrf.mxu0
        %v1097 = vadd.f32 %v932, %v1096
        %v1098 = vpop.f32.mrf.mxu0
        %1099 = vmatprep.mubr.bf16.mxu0 0
        %1100 = vmatmul.mubr.bf16.gmra.mxu0 %v1014
        %v1101 = vpop.f32.mrf.mxu0
        %v1102 = vadd.f32 %v937, %v1101
        %v1103 = vpop.f32.mrf.mxu0
        %v1104 = vpop.f32.mrf.mxu0
        %v1105 = vadd.f32 %v942, %v1104
        %v1106 = vpop.f32.mrf.mxu0
        %1107 = vmatprep.mubr.bf16.mxu0 0
        %1108 = vmatmul.mubr.bf16.gmra.mxu0 %v1017
        %v1109 = vpop.f32.mrf.mxu0
        %v1110 = vadd.f32 %v947, %v1109
        %v1111 = vpop.f32.mrf.mxu0
        %v1112 = vpop.f32.mrf.mxu0
        %v1113 = vadd.f32 %v952, %v1112
        %v1114 = vpop.f32.mrf.mxu0
        %1115 = vdwg.mxu0
        %1116 = vmatprep.subr.bf16.mxu0 0
        %1117 = vmatpush1.bf16.msra.mxu0 0
        %1118 = vmatprep.subr.bf16.mxu0 0
        %1119 = vmatpush1.bf16.msra.mxu0 0
        %1120 = vmatprep.subr.bf16.mxu0 0
        %1121 = vmatpush1.bf16.msra.mxu0 0
        %1122 = vmatprep.subr.bf16.mxu0 0
        %1123 = vmatpush1.bf16.msra.mxu0 0
        %1124 = vmatprep.subr.bf16.mxu0 0
        %1125 = vmatpush1.bf16.msra.mxu0 0
        %1126 = vmatprep.subr.bf16.mxu0 0
        %1127 = vmatpush1.bf16.msra.mxu0 0
        %1128 = vmatprep.subr.bf16.mxu0 0
        %1129 = vmatpush1.bf16.msra.mxu0 %v829
        %1130 = vmatprep.subr.bf16.mxu0 0
        %1131 = vmatpush1.bf16.msra.mxu0 %v828
        %1132 = vmatprep.subr.bf16.mxu0 0
        %1133 = vmatpush2.bf16.msra.mxu0 0
        %1134 = vmatprep.subr.bf16.mxu0 0
        %1135 = vmatpush2.bf16.msra.mxu0 0
        %1136 = vmatprep.subr.bf16.mxu0 0
        %1137 = vmatpush2.bf16.msra.mxu0 0
        %1138 = vmatprep.subr.bf16.mxu0 0
        %1139 = vmatpush2.bf16.msra.mxu0 0
        %1140 = vmatprep.subr.bf16.mxu0 0
        %1141 = vmatpush2.bf16.msra.mxu0 0
        %1142 = vmatprep.subr.bf16.mxu0 0
        %1143 = vmatpush2.bf16.msra.mxu0 0
        %1144 = vmatprep.subr.bf16.mxu0 0
        %1145 = vmatpush2.bf16.msra.mxu0 0
        %1146 = vmatprep.subr.bf16.mxu0 0
        %1147 = vmatpush2.bf16.msra.mxu0 0
        %1148 = vmatprep.mubr.bf16.mxu0 0
        %1149 = vmatmul.mubr.bf16.gmra.mxu0 %v996
        %v1150 = vpop.f32.mrf.mxu0
        %v1151 = vadd.f32 %v877, %v1150
        %v1152 = vpop.f32.mrf.mxu0
        %v1153 = vpop.f32.mrf.mxu0
        %v1154 = vadd.f32 %v882, %v1153
        %v1155 = vpop.f32.mrf.mxu0
        %1156 = vmatprep.mubr.bf16.mxu0 0
        %1157 = vmatmul.mubr.bf16.gmra.mxu0 %v999
        %v1158 = vpop.f32.mrf.mxu0
        %v1159 = vadd.f32 %v887, %v1158
        %v1160 = vpop.f32.mrf.mxu0
        %v1161 = vpop.f32.mrf.mxu0
        %v1162 = vadd.f32 %v892, %v1161
        %v1163 = vpop.f32.mrf.mxu0
        %1164 = vmatprep.mubr.bf16.mxu0 0
        %1165 = vmatmul.mubr.bf16.gmra.mxu0 %v1002
        %v1166 = vpop.f32.mrf.mxu0
        %v1167 = vadd.f32 %v897, %v1166
        %v1168 = vpop.f32.mrf.mxu0
        %v1169 = vpop.f32.mrf.mxu0
        %v1170 = vadd.f32 %v902, %v1169
        %v1171 = vpop.f32.mrf.mxu0
        %1172 = vmatprep.mubr.bf16.mxu0 0
        %1173 = vmatmul.mubr.bf16.gmra.mxu0 %v1005
        %v1174 = vpop.f32.mrf.mxu0
        %v1175 = vadd.f32 %v907, %v1174
        %v1176 = vpop.f32.mrf.mxu0
        %v1177 = vpop.f32.mrf.mxu0
        %v1178 = vadd.f32 %v912, %v1177
        %v1179 = vpop.f32.mrf.mxu0
        %1180 = vmatprep.mubr.bf16.mxu0 0
        %1181 = vmatmul.mubr.bf16.gmra.mxu0 %v1008
        %v1182 = vpop.f32.mrf.mxu0
        %v1183 = vadd.f32 %v917, %v1182
        %v1184 = vpop.f32.mrf.mxu0
        %v1185 = vpop.f32.mrf.mxu0
        %v1186 = vadd.f32 %v922, %v1185
        %v1187 = vpop.f32.mrf.mxu0
        %1188 = vmatprep.mubr.bf16.mxu0 0
        %1189 = vmatmul.mubr.bf16.gmra.mxu0 %v1011
        %v1190 = vpop.f32.mrf.mxu0
        %v1191 = vadd.f32 %v927, %v1190
        %v1192 = vpop.f32.mrf.mxu0
        %v1193 = vpop.f32.mrf.mxu0
        %v1194 = vadd.f32 %v932, %v1193
        %v1195 = vpop.f32.mrf.mxu0
        %1196 = vmatprep.mubr.bf16.mxu0 0
        %1197 = vmatmul.mubr.bf16.gmra.mxu0 %v1014
        %v1198 = vpop.f32.mrf.mxu0
        %v1199 = vadd.f32 %v937, %v1198
        %v1200 = vpop.f32.mrf.mxu0
        %v1201 = vpop.f32.mrf.mxu0
        %v1202 = vadd.f32 %v942, %v1201
        %v1203 = vpop.f32.mrf.mxu0
        %1204 = vmatprep.mubr.bf16.mxu0 0
        %1205 = vmatmul.mubr.bf16.gmra.mxu0 %v1017
        %v1206 = vpop.f32.mrf.mxu0
        %v1207 = vadd.f32 %v947, %v1206
        %v1208 = vpop.f32.mrf.mxu0
        %v1209 = vpop.f32.mrf.mxu0
        %v1210 = vadd.f32 %v952, %v1209
        %v1211 = vpop.f32.mrf.mxu0
        %1212 = vdwg.mxu0
        %v1213 = vmul.f32 %v1054, 0.5
        %v1214 = vmul.f32 %v1057, 0.5
        %v1215 = vmul.f32 %v1062, 0.5
        %v1216 = vmul.f32 %v1065, 0.5
        %v1217 = vmul.f32 %v1070, 0.5
        %v1218 = vmul.f32 %v1073, 0.5
        %v1219 = vmul.f32 %v1078, 0.5
        %v1220 = vmul.f32 %v1081, 0.5
        %v1221 = vmul.f32 %v1086, 0.5
        %v1222 = vmul.f32 %v1089, 0.5
        %v1223 = vmul.f32 %v1094, 0.5
        %v1224 = vmul.f32 %v1097, 0.5
        %v1225 = vmul.f32 %v1102, 0.5
        %v1226 = vmul.f32 %v1105, 0.5
        %v1227 = vmul.f32 %v1110, 0.5
        %v1228 = vmul.f32 %v1113, 0.5
        %v1229 = vmul.f32 %v1151, 0.5
        %v1230 = vmul.f32 %v1154, 0.5
        %v1231 = vmul.f32 %v1159, 0.5
        %v1232 = vmul.f32 %v1162, 0.5
        %v1233 = vmul.f32 %v1167, 0.5
        %v1234 = vmul.f32 %v1170, 0.5
        %v1235 = vmul.f32 %v1175, 0.5
        %v1236 = vmul.f32 %v1178, 0.5
        %v1237 = vmul.f32 %v1183, 0.5
        %v1238 = vmul.f32 %v1186, 0.5
        %v1239 = vmul.f32 %v1191, 0.5
        %v1240 = vmul.f32 %v1194, 0.5
        %v1241 = vmul.f32 %v1199, 0.5
        %v1242 = vmul.f32 %v1202, 0.5
        %v1243 = vmul.f32 %v1207, 0.5
        %v1244 = vmul.f32 %v1210, 0.5
        %v1245 = vmul.f32 %v1054, 0.70710677
        %v1246 = vmul.f32 %v1057, 0.70710677
        %v1247 = vmul.f32 %v1062, 0.70710677
        %v1248 = vmul.f32 %v1065, 0.70710677
        %v1249 = vmul.f32 %v1070, 0.70710677
        %v1250 = vmul.f32 %v1073, 0.70710677
        %v1251 = vmul.f32 %v1078, 0.70710677
        %v1252 = vmul.f32 %v1081, 0.70710677
        %v1253 = vmul.f32 %v1086, 0.70710677
        %v1254 = vmul.f32 %v1089, 0.70710677
        %v1255 = vmul.f32 %v1094, 0.70710677
        %v1256 = vmul.f32 %v1097, 0.70710677
        %v1257 = vmul.f32 %v1102, 0.70710677
        %v1258 = vmul.f32 %v1105, 0.70710677
        %v1259 = vmul.f32 %v1110, 0.70710677
        %v1260 = vmul.f32 %v1113, 0.70710677
        %v1261 = vmul.f32 %v1151, 0.70710677
        %v1262 = vmul.f32 %v1154, 0.70710677
        %v1263 = vmul.f32 %v1159, 0.70710677
        %v1264 = vmul.f32 %v1162, 0.70710677
        %v1265 = vmul.f32 %v1167, 0.70710677
        %v1266 = vmul.f32 %v1170, 0.70710677
        %v1267 = vmul.f32 %v1175, 0.70710677
        %v1268 = vmul.f32 %v1178, 0.70710677
        %v1269 = vmul.f32 %v1183, 0.70710677
        %v1270 = vmul.f32 %v1186, 0.70710677
        %v1271 = vmul.f32 %v1191, 0.70710677
        %v1272 = vmul.f32 %v1194, 0.70710677
        %v1273 = vmul.f32 %v1199, 0.70710677
        %v1274 = vmul.f32 %v1202, 0.70710677
        %v1275 = vmul.f32 %v1207, 0.70710677
        %v1276 = vmul.f32 %v1210, 0.70710677
        %v1277 = verf.f32.pop %v1245
        %v1278 = verf.f32.pop %v1246
        %v1279 = verf.f32.pop %v1247
        %v1280 = verf.f32.pop %v1248
        %v1281 = verf.f32.pop %v1249
        %v1282 = verf.f32.pop %v1250
        %v1283 = verf.f32.pop %v1251
        %v1284 = verf.f32.pop %v1252
        %v1285 = verf.f32.pop %v1253
        %v1286 = verf.f32.pop %v1254
        %v1287 = verf.f32.pop %v1255
        %v1288 = verf.f32.pop %v1256
        %v1289 = verf.f32.pop %v1257
        %v1290 = verf.f32.pop %v1258
        %v1291 = verf.f32.pop %v1259
        %v1292 = verf.f32.pop %v1260
        %v1293 = verf.f32.pop %v1261
        %v1294 = verf.f32.pop %v1262
        %v1295 = verf.f32.pop %v1263
        %v1296 = verf.f32.pop %v1264
        %v1297 = verf.f32.pop %v1265
        %v1298 = verf.f32.pop %v1266
        %v1299 = verf.f32.pop %v1267
        %v1300 = verf.f32.pop %v1268
        %v1301 = verf.f32.pop %v1269
        %v1302 = verf.f32.pop %v1270
        %v1303 = verf.f32.pop %v1271
        %v1304 = verf.f32.pop %v1272
        %v1305 = verf.f32.pop %v1273
        %v1306 = verf.f32.pop %v1274
        %v1307 = verf.f32.pop %v1275
        %v1308 = verf.f32.pop %v1276
        %v1309 = vadd.f32 %v1277, 1.0
        %v1310 = vadd.f32 %v1278, 1.0
        %v1311 = vadd.f32 %v1279, 1.0
        %v1312 = vadd.f32 %v1280, 1.0
        %v1313 = vadd.f32 %v1281, 1.0
        %v1314 = vadd.f32 %v1282, 1.0
        %v1315 = vadd.f32 %v1283, 1.0
        %v1316 = vadd.f32 %v1284, 1.0
        %v1317 = vadd.f32 %v1285, 1.0
        %v1318 = vadd.f32 %v1286, 1.0
        %v1319 = vadd.f32 %v1287, 1.0
        %v1320 = vadd.f32 %v1288, 1.0
        %v1321 = vadd.f32 %v1289, 1.0
        %v1322 = vadd.f32 %v1290, 1.0
        %v1323 = vadd.f32 %v1291, 1.0
        %v1324 = vadd.f32 %v1292, 1.0
        %v1325 = vadd.f32 %v1293, 1.0
        %v1326 = vadd.f32 %v1294, 1.0
        %v1327 = vadd.f32 %v1295, 1.0
        %v1328 = vadd.f32 %v1296, 1.0
        %v1329 = vadd.f32 %v1297, 1.0
        %v1330 = vadd.f32 %v1298, 1.0
        %v1331 = vadd.f32 %v1299, 1.0
        %v1332 = vadd.f32 %v1300, 1.0
        %v1333 = vadd.f32 %v1301, 1.0
        %v1334 = vadd.f32 %v1302, 1.0
        %v1335 = vadd.f32 %v1303, 1.0
        %v1336 = vadd.f32 %v1304, 1.0
        %v1337 = vadd.f32 %v1305, 1.0
        %v1338 = vadd.f32 %v1306, 1.0
        %v1339 = vadd.f32 %v1307, 1.0
        %v1340 = vadd.f32 %v1308, 1.0
        %v1341 = vmul.f32 %v1213, %v1309
        %v1342 = vmul.f32 %v1214, %v1310
        %v1343 = vmul.f32 %v1215, %v1311
        %v1344 = vmul.f32 %v1216, %v1312
        %v1345 = vmul.f32 %v1217, %v1313
        %v1346 = vmul.f32 %v1218, %v1314
        %v1347 = vmul.f32 %v1219, %v1315
        %v1348 = vmul.f32 %v1220, %v1316
        %v1349 = vmul.f32 %v1221, %v1317
        %v1350 = vmul.f32 %v1222, %v1318
        %v1351 = vmul.f32 %v1223, %v1319
        %v1352 = vmul.f32 %v1224, %v1320
        %v1353 = vmul.f32 %v1225, %v1321
        %v1354 = vmul.f32 %v1226, %v1322
        %v1355 = vmul.f32 %v1227, %v1323
        %v1356 = vmul.f32 %v1228, %v1324
        %v1357 = vmul.f32 %v1229, %v1325
        %v1358 = vmul.f32 %v1230, %v1326
        %v1359 = vmul.f32 %v1231, %v1327
        %v1360 = vmul.f32 %v1232, %v1328
        %v1361 = vmul.f32 %v1233, %v1329
        %v1362 = vmul.f32 %v1234, %v1330
        %v1363 = vmul.f32 %v1235, %v1331
        %v1364 = vmul.f32 %v1236, %v1332
        %v1365 = vmul.f32 %v1237, %v1333
        %v1366 = vmul.f32 %v1238, %v1334
        %v1367 = vmul.f32 %v1239, %v1335
        %v1368 = vmul.f32 %v1240, %v1336
        %v1369 = vmul.f32 %v1241, %v1337
        %v1370 = vmul.f32 %v1242, %v1338
        %v1371 = vmul.f32 %v1243, %v1339
        %v1372 = vmul.f32 %v1244, %v1340
        %v1373 = vpack.c.bf16 %v1342, %v1341
        %v1374 = vpack.c.bf16 %v1344, %v1343
        %v1375 = vpack.c.bf16 %v1346, %v1345
        %v1376 = vpack.c.bf16 %v1348, %v1347
        %v1377 = vpack.c.bf16 %v1350, %v1349
        %v1378 = vpack.c.bf16 %v1352, %v1351
        %v1379 = vpack.c.bf16 %v1354, %v1353
        %v1380 = vpack.c.bf16 %v1356, %v1355
        %v1381 = vpack.c.bf16 %v1358, %v1357
        %v1382 = vpack.c.bf16 %v1360, %v1359
        %v1383 = vpack.c.bf16 %v1362, %v1361
        %v1384 = vpack.c.bf16 %v1364, %v1363
        %v1385 = vpack.c.bf16 %v1366, %v1365
        %v1386 = vpack.c.bf16 %v1368, %v1367
        %v1387 = vpack.c.bf16 %v1370, %v1369
        %v1388 = vpack.c.bf16 %v1372, %v1371
        %s1389 = smul.u32 %s34, 32
        %s1390 = scalar_lea.vmem %s8, %s1389
        %v1391 = vld [vmem:[%s1390] sm:$0xff]
        %v1392 = vld [vmem:[%s1390 + $0x8] sm:$0xff]
        %v1393 = vld [vmem:[%s1390 + $0x10] sm:$0xff]
        %v1394 = vld [vmem:[%s1390 + $0x18] sm:$0xff]
        %1396 = vset.pattern.permute.xlu0 0
        %1397 = vperm.xlu0 %1396, %v1391
        %v1398 = vpop.permute.xlu0 %1397
        %1401 = vset.pattern.permute.xlu0 0
        %1402 = vperm.xlu0 %1401, %v1392
        %v1403 = vpop.permute.xlu0 %1402
        %1406 = vset.pattern.permute.xlu0 0
        %1407 = vperm.xlu0 %1406, %v1393
        %v1408 = vpop.permute.xlu0 %1407
        %1411 = vset.pattern.permute.xlu0 0
        %1412 = vperm.xlu0 %1411, %v1394
        %v1413 = vpop.permute.xlu0 %1412
        %v1419 = vunpack.c.l.b16 %v852
        %v1420 = vunpack.c.l.b16 %v853
        %v1421 = vunpack.c.l.b16 %v854
        %v1422 = vunpack.c.l.b16 %v855
        %v1423 = vpack.c.b16 %v1420, %v1419
        %v1424 = vpack.c.b16 %v1422, %v1421
        %1427 = vmatprep.subr.bf16.mxu0 0
        %1428 = vmatpush1.bf16.msra.mxu0 %v1380
        %1429 = vmatprep.subr.bf16.mxu0 0
        %1430 = vmatpush1.bf16.msra.mxu0 %v1379
        %1431 = vmatprep.subr.bf16.mxu0 0
        %1432 = vmatpush1.bf16.msra.mxu0 %v1378
        %1433 = vmatprep.subr.bf16.mxu0 0
        %1434 = vmatpush1.bf16.msra.mxu0 %v1377
        %1435 = vmatprep.subr.bf16.mxu0 0
        %1436 = vmatpush1.bf16.msra.mxu0 %v1376
        %1437 = vmatprep.subr.bf16.mxu0 0
        %1438 = vmatpush1.bf16.msra.mxu0 %v1375
        %1439 = vmatprep.subr.bf16.mxu0 0
        %1440 = vmatpush1.bf16.msra.mxu0 %v1374
        %1441 = vmatprep.subr.bf16.mxu0 0
        %1442 = vmatpush1.bf16.msra.mxu0 %v1373
        %1443 = vmatprep.subr.bf16.mxu0 0
        %1444 = vmatpush2.bf16.msra.mxu0 0
        %1445 = vmatprep.subr.bf16.mxu0 0
        %1446 = vmatpush2.bf16.msra.mxu0 0
        %1447 = vmatprep.subr.bf16.mxu0 0
        %1448 = vmatpush2.bf16.msra.mxu0 0
        %1449 = vmatprep.subr.bf16.mxu0 0
        %1450 = vmatpush2.bf16.msra.mxu0 0
        %1451 = vmatprep.subr.bf16.mxu0 0
        %1452 = vmatpush2.bf16.msra.mxu0 0
        %1453 = vmatprep.subr.bf16.mxu0 0
        %1454 = vmatpush2.bf16.msra.mxu0 0
        %1455 = vmatprep.subr.bf16.mxu0 0
        %1456 = vmatpush2.bf16.msra.mxu0 0
        %1457 = vmatprep.subr.bf16.mxu0 0
        %1458 = vmatpush2.bf16.msra.mxu0 0
        %1459 = vmatprep.mubr.bf16.mxu0 0
        %1460 = vmatmul.mubr.bf16.gmra.mxu0 %v1423
        %v1461 = vpop.f32.mrf.mxu0
        %v1462 = vadd.f32 %v1398, %v1461
        %v1463 = vpop.f32.mrf.mxu0
        %v1464 = vpop.f32.mrf.mxu0
        %v1465 = vadd.f32 %v1403, %v1464
        %v1466 = vpop.f32.mrf.mxu0
        %1467 = vmatprep.mubr.bf16.mxu0 0
        %1468 = vmatmul.mubr.bf16.gmra.mxu0 %v1424
        %v1469 = vpop.f32.mrf.mxu0
        %v1470 = vadd.f32 %v1408, %v1469
        %v1471 = vpop.f32.mrf.mxu0
        %v1472 = vpop.f32.mrf.mxu0
        %v1473 = vadd.f32 %v1413, %v1472
        %v1474 = vpop.f32.mrf.mxu0
        %1475 = vdwg.mxu0
        %1476 = vmatprep.subr.bf16.mxu0 0
        %1477 = vmatpush1.bf16.msra.mxu0 %v1388
        %1478 = vmatprep.subr.bf16.mxu0 0
        %1479 = vmatpush1.bf16.msra.mxu0 %v1387
        %1480 = vmatprep.subr.bf16.mxu0 0
        %1481 = vmatpush1.bf16.msra.mxu0 %v1386
        %1482 = vmatprep.subr.bf16.mxu0 0
        %1483 = vmatpush1.bf16.msra.mxu0 %v1385
        %1484 = vmatprep.subr.bf16.mxu0 0
        %1485 = vmatpush1.bf16.msra.mxu0 %v1384
        %1486 = vmatprep.subr.bf16.mxu0 0
        %1487 = vmatpush1.bf16.msra.mxu0 %v1383
        %1488 = vmatprep.subr.bf16.mxu0 0
        %1489 = vmatpush1.bf16.msra.mxu0 %v1382
        %1490 = vmatprep.subr.bf16.mxu0 0
        %1491 = vmatpush1.bf16.msra.mxu0 %v1381
        %1492 = vmatprep.subr.bf16.mxu0 0
        %1493 = vmatpush2.bf16.msra.mxu0 0
        %1494 = vmatprep.subr.bf16.mxu0 0
        %1495 = vmatpush2.bf16.msra.mxu0 0
        %1496 = vmatprep.subr.bf16.mxu0 0
        %1497 = vmatpush2.bf16.msra.mxu0 0
        %1498 = vmatprep.subr.bf16.mxu0 0
        %1499 = vmatpush2.bf16.msra.mxu0 0
        %1500 = vmatprep.subr.bf16.mxu0 0
        %1501 = vmatpush2.bf16.msra.mxu0 0
        %1502 = vmatprep.subr.bf16.mxu0 0
        %1503 = vmatpush2.bf16.msra.mxu0 0
        %1504 = vmatprep.subr.bf16.mxu0 0
        %1505 = vmatpush2.bf16.msra.mxu0 0
        %1506 = vmatprep.subr.bf16.mxu0 0
        %1507 = vmatpush2.bf16.msra.mxu0 0
        %1508 = vmatprep.mubr.bf16.mxu0 0
        %1509 = vmatmul.mubr.bf16.gmra.mxu0 %v1423
        %v1510 = vpop.f32.mrf.mxu0
        %v1511 = vadd.f32 %v1398, %v1510
        %v1512 = vpop.f32.mrf.mxu0
        %v1513 = vpop.f32.mrf.mxu0
        %v1514 = vadd.f32 %v1403, %v1513
        %v1515 = vpop.f32.mrf.mxu0
        %1516 = vmatprep.mubr.bf16.mxu0 0
        %1517 = vmatmul.mubr.bf16.gmra.mxu0 %v1424
        %v1518 = vpop.f32.mrf.mxu0
        %v1519 = vadd.f32 %v1408, %v1518
        %v1520 = vpop.f32.mrf.mxu0
        %v1521 = vpop.f32.mrf.mxu0
        %v1522 = vadd.f32 %v1413, %v1521
        %v1523 = vpop.f32.mrf.mxu0
        %1524 = vdwg.mxu0
        %v1525 = vadd.f32 %v697, %v1462
        %v1526 = vadd.f32 %v698, %v1465
        %v1527 = vadd.f32 %v699, %v1470
        %v1528 = vadd.f32 %v700, %v1473
        %v1529 = vadd.f32 %v701, %v1511
        %v1530 = vadd.f32 %v702, %v1514
        %v1531 = vadd.f32 %v703, %v1519
        %v1532 = vadd.f32 %v704, %v1522
        %s1533 = scalar_lea.vmem %s9, %s34
        %v1534 = vld [vmem:[%s1533] sm:$0x1]
        %s1535 = scalar_lea.vmem %s10, %s34
        %v1536 = vld [vmem:[%s1535] sm:$0x1]
        %1537 = vadd.xlane.f32.xlu0 %v1525
        %v1538 = vpop.xlane.xlu0 %1537
        %1539 = vadd.xlane.f32.xlu0 %v1526
        %v1540 = vpop.xlane.xlu0 %1539
        %1541 = vadd.xlane.f32.xlu0 %v1527
        %v1542 = vpop.xlane.xlu0 %1541
        %1543 = vadd.xlane.f32.xlu0 %v1528
        %v1544 = vpop.xlane.xlu0 %1543
        %1545 = vadd.xlane.f32.xlu0 %v1529
        %v1546 = vpop.xlane.xlu0 %1545
        %1547 = vadd.xlane.f32.xlu0 %v1530
        %v1548 = vpop.xlane.xlu0 %1547
        %1549 = vadd.xlane.f32.xlu0 %v1531
        %v1550 = vpop.xlane.xlu0 %1549
        %1551 = vadd.xlane.f32.xlu0 %v1532
        %v1552 = vpop.xlane.xlu0 %1551
        %v1553 = vmul.f32 %v1538, %v725
        %v1554 = vmul.f32 %v1540, %v725
        %v1555 = vmul.f32 %v1542, %v725
        %v1556 = vmul.f32 %v1544, %v725
        %v1557 = vmul.f32 %v1546, %v725
        %v1558 = vmul.f32 %v1548, %v725
        %v1559 = vmul.f32 %v1550, %v725
        %v1560 = vmul.f32 %v1552, %v725
        %v1561 = vsub.f32 %v1525, %v1553
        %v1562 = vsub.f32 %v1526, %v1554
        %v1563 = vsub.f32 %v1527, %v1555
        %v1564 = vsub.f32 %v1528, %v1556
        %v1565 = vsub.f32 %v1529, %v1557
        %v1566 = vsub.f32 %v1530, %v1558
        %v1567 = vsub.f32 %v1531, %v1559
        %v1568 = vsub.f32 %v1532, %v1560
        %v1569 = vmul.f32 %v1561, %v1561
        %v1570 = vmul.f32 %v1562, %v1562
        %v1571 = vmul.f32 %v1563, %v1563
        %v1572 = vmul.f32 %v1564, %v1564
        %v1573 = vmul.f32 %v1565, %v1565
        %v1574 = vmul.f32 %v1566, %v1566
        %v1575 = vmul.f32 %v1567, %v1567
        %v1576 = vmul.f32 %v1568, %v1568
        %1577 = vadd.xlane.f32.xlu0 %v1569
        %v1578 = vpop.xlane.xlu0 %1577
        %1579 = vadd.xlane.f32.xlu0 %v1570
        %v1580 = vpop.xlane.xlu0 %1579
        %1581 = vadd.xlane.f32.xlu0 %v1571
        %v1582 = vpop.xlane.xlu0 %1581
        %1583 = vadd.xlane.f32.xlu0 %v1572
        %v1584 = vpop.xlane.xlu0 %1583
        %1585 = vadd.xlane.f32.xlu0 %v1573
        %v1586 = vpop.xlane.xlu0 %1585
        %1587 = vadd.xlane.f32.xlu0 %v1574
        %v1588 = vpop.xlane.xlu0 %1587
        %1589 = vadd.xlane.f32.xlu0 %v1575
        %v1590 = vpop.xlane.xlu0 %1589
        %1591 = vadd.xlane.f32.xlu0 %v1576
        %v1592 = vpop.xlane.xlu0 %1591
        %v1593 = vmul.f32 %v1578, %v725
        %v1594 = vmul.f32 %v1580, %v725
        %v1595 = vmul.f32 %v1582, %v725
        %v1596 = vmul.f32 %v1584, %v725
        %v1597 = vmul.f32 %v1586, %v725
        %v1598 = vmul.f32 %v1588, %v725
        %v1599 = vmul.f32 %v1590, %v725
        %v1600 = vmul.f32 %v1592, %v725
        %v1601 = vadd.f32 %v1593, 1e-05
        %v1602 = vadd.f32 %v1594, 1e-05
        %v1603 = vadd.f32 %v1595, 1e-05
        %v1604 = vadd.f32 %v1596, 1e-05
        %v1605 = vadd.f32 %v1597, 1e-05
        %v1606 = vadd.f32 %v1598, 1e-05
        %v1607 = vadd.f32 %v1599, 1e-05
        %v1608 = vadd.f32 %v1600, 1e-05
        %v1609 = vrsqrt.pop %v1601
        %v1610 = vrsqrt.pop %v1602
        %v1611 = vrsqrt.pop %v1603
        %v1612 = vrsqrt.pop %v1604
        %v1613 = vrsqrt.pop %v1605
        %v1614 = vrsqrt.pop %v1606
        %v1615 = vrsqrt.pop %v1607
        %v1616 = vrsqrt.pop %v1608
        %v1617 = vmul.f32 %v1561, %v1609
        %v1618 = vmul.f32 %v1562, %v1610
        %v1619 = vmul.f32 %v1563, %v1611
        %v1620 = vmul.f32 %v1564, %v1612
        %v1621 = vmul.f32 %v1565, %v1613
        %v1622 = vmul.f32 %v1566, %v1614
        %v1623 = vmul.f32 %v1567, %v1615
        %v1624 = vmul.f32 %v1568, %v1616
        %v1626 = vlaneseq
        %v1627 = vshrl.u32 %v1626, 7
        %v1628 = vsub.s32 0, %v1627
        %v1629 = vrot.slane %v1534, %v1628
        %v1631 = vmul.f32 %v1617, %v1629
        %v1632 = vmul.f32 %v1618, %v1629
        %v1633 = vmul.f32 %v1619, %v1629
        %v1634 = vmul.f32 %v1620, %v1629
        %v1635 = vmul.f32 %v1621, %v1629
        %v1636 = vmul.f32 %v1622, %v1629
        %v1637 = vmul.f32 %v1623, %v1629
        %v1638 = vmul.f32 %v1624, %v1629
        %v1640 = vlaneseq
        %v1641 = vshrl.u32 %v1640, 7
        %v1642 = vsub.s32 0, %v1641
        %v1643 = vrot.slane %v1536, %v1642
        %v1645 = vadd.f32 %v1631, %v1643
        %v1646 = vadd.f32 %v1632, %v1643
        %v1647 = vadd.f32 %v1633, %v1643
        %v1648 = vadd.f32 %v1634, %v1643
        %v1649 = vadd.f32 %v1635, %v1643
        %v1650 = vadd.f32 %v1636, %v1643
        %v1651 = vadd.f32 %v1637, %v1643
        %v1652 = vadd.f32 %v1638, %v1643
        %v1653 = vpack.c.bf16 %v1646, %v1645
        %v1654 = vpack.c.bf16 %v1648, %v1647
        %v1655 = vpack.c.bf16 %v1650, %v1649
        %v1656 = vpack.c.bf16 %v1652, %v1651
        %s1657 = smul.addr %s830, 4
        %s1658 = scalar_lea.vmem %s11, %s1657
        %v1659 = vld [vmem:[%s1658] sm:$0xf]
        %v1660 = vld [vmem:[%s1658 + $0x4] sm:$0xf]
        %v1661 = vld [vmem:[%s1658 + $0x8] sm:$0xf]
        %v1662 = vld [vmem:[%s1658 + $0xc] sm:$0xf]
        %v1663 = vld [vmem:[%s1658 + $0x10] sm:$0xf]
        %v1664 = vld [vmem:[%s1658 + $0x14] sm:$0xf]
        %v1665 = vld [vmem:[%s1658 + $0x18] sm:$0xf]
        %v1666 = vld [vmem:[%s1658 + $0x1c] sm:$0xf]
        %v1667 = vld [vmem:[%s1658 + $0x20] sm:$0xf]
        %v1668 = vld [vmem:[%s1658 + $0x24] sm:$0xf]
        %v1669 = vld [vmem:[%s1658 + $0x28] sm:$0xf]
        %v1670 = vld [vmem:[%s1658 + $0x2c] sm:$0xf]
        %v1671 = vld [vmem:[%s1658 + $0x30] sm:$0xf]
        %v1672 = vld [vmem:[%s1658 + $0x34] sm:$0xf]
        %v1673 = vld [vmem:[%s1658 + $0x38] sm:$0xf]
        %v1674 = vld [vmem:[%s1658 + $0x3c] sm:$0xf]
        %s1675 = scalar_lea.vmem %s12, %s34
        %v1676 = vld [vmem:[%s1675] sm:$0x1]
        %v1678 = vlaneseq
        %v1679 = vshrl.u32 %v1678, 7
        %v1680 = vsub.s32 0, %v1679
        %v1681 = vrot.slane %v1676, %v1680
        %v1699 = vunpack.c.l.b16 %v1659
        %v1700 = vunpack.c.l.b16 %v1660
        %v1701 = vunpack.c.l.b16 %v1661
        %v1702 = vunpack.c.l.b16 %v1662
        %v1703 = vunpack.c.l.b16 %v1663
        %v1704 = vunpack.c.l.b16 %v1664
        %v1705 = vunpack.c.l.b16 %v1665
        %v1706 = vunpack.c.l.b16 %v1666
        %v1707 = vunpack.c.l.b16 %v1667
        %v1708 = vunpack.c.l.b16 %v1668
        %v1709 = vunpack.c.l.b16 %v1669
        %v1710 = vunpack.c.l.b16 %v1670
        %v1711 = vunpack.c.l.b16 %v1671
        %v1712 = vunpack.c.l.b16 %v1672
        %v1713 = vunpack.c.l.b16 %v1673
        %v1714 = vunpack.c.l.b16 %v1674
        %v1715 = vpack.c.b16 %v1700, %v1699
        %v1716 = vpack.c.b16 %v1702, %v1701
        %v1717 = vpack.c.b16 %v1704, %v1703
        %v1718 = vpack.c.b16 %v1706, %v1705
        %v1719 = vpack.c.b16 %v1708, %v1707
        %v1720 = vpack.c.b16 %v1710, %v1709
        %v1721 = vpack.c.b16 %v1712, %v1711
        %v1722 = vpack.c.b16 %v1714, %v1713
        %1731 = vmatprep.subr.bf16.mxu0 0
        %1732 = vmatpush1.bf16.msra.mxu0 %v1722
        %1733 = vmatprep.subr.bf16.mxu0 0
        %1734 = vmatpush1.bf16.msra.mxu0 %v1721
        %1735 = vmatprep.subr.bf16.mxu0 0
        %1736 = vmatpush1.bf16.msra.mxu0 %v1720
        %1737 = vmatprep.subr.bf16.mxu0 0
        %1738 = vmatpush1.bf16.msra.mxu0 %v1719
        %1739 = vmatprep.subr.bf16.mxu0 0
        %1740 = vmatpush1.bf16.msra.mxu0 %v1718
        %1741 = vmatprep.subr.bf16.mxu0 0
        %1742 = vmatpush1.bf16.msra.mxu0 %v1717
        %1743 = vmatprep.subr.bf16.mxu0 0
        %1744 = vmatpush1.bf16.msra.mxu0 %v1716
        %1745 = vmatprep.subr.bf16.mxu0 0
        %1746 = vmatpush1.bf16.msra.mxu0 %v1715
        %1747 = vmatprep.subr.bf16.mxu0 0
        %1748 = vmatpush2.bf16.msra.mxu0 0
        %1749 = vmatprep.subr.bf16.mxu0 0
        %1750 = vmatpush2.bf16.msra.mxu0 0
        %1751 = vmatprep.subr.bf16.mxu0 0
        %1752 = vmatpush2.bf16.msra.mxu0 0
        %1753 = vmatprep.subr.bf16.mxu0 0
        %1754 = vmatpush2.bf16.msra.mxu0 0
        %1755 = vmatprep.subr.bf16.mxu0 0
        %1756 = vmatpush2.bf16.msra.mxu0 0
        %1757 = vmatprep.subr.bf16.mxu0 0
        %1758 = vmatpush2.bf16.msra.mxu0 0
        %1759 = vmatprep.subr.bf16.mxu0 0
        %1760 = vmatpush2.bf16.msra.mxu0 0
        %1761 = vmatprep.subr.bf16.mxu0 0
        %1762 = vmatpush2.bf16.msra.mxu0 0
        %1763 = vmatprep.mubr.bf16.mxu0 0
        %1764 = vmatmul.mubr.bf16.gmra.mxu0 %v1653
        %v1765 = vpop.f32.mrf.mxu0
        %v1766 = vadd.f32 %v1681, %v1765
        %v1767 = vpop.f32.mrf.mxu0
        %v1768 = vpop.f32.mrf.mxu0
        %v1769 = vadd.f32 %v1681, %v1768
        %v1770 = vpop.f32.mrf.mxu0
        %1771 = vmatprep.mubr.bf16.mxu0 0
        %1772 = vmatmul.mubr.bf16.gmra.mxu0 %v1654
        %v1773 = vpop.f32.mrf.mxu0
        %v1774 = vadd.f32 %v1681, %v1773
        %v1775 = vpop.f32.mrf.mxu0
        %v1776 = vpop.f32.mrf.mxu0
        %v1777 = vadd.f32 %v1681, %v1776
        %v1778 = vpop.f32.mrf.mxu0
        %1779 = vmatprep.mubr.bf16.mxu0 0
        %1780 = vmatmul.mubr.bf16.gmra.mxu0 %v1655
        %v1781 = vpop.f32.mrf.mxu0
        %v1782 = vadd.f32 %v1681, %v1781
        %v1783 = vpop.f32.mrf.mxu0
        %v1784 = vpop.f32.mrf.mxu0
        %v1785 = vadd.f32 %v1681, %v1784
        %v1786 = vpop.f32.mrf.mxu0
        %1787 = vmatprep.mubr.bf16.mxu0 0
        %1788 = vmatmul.mubr.bf16.gmra.mxu0 %v1656
        %v1789 = vpop.f32.mrf.mxu0
        %v1790 = vadd.f32 %v1681, %v1789
        %v1791 = vpop.f32.mrf.mxu0
        %v1792 = vpop.f32.mrf.mxu0
        %v1793 = vadd.f32 %v1681, %v1792
        %v1794 = vpop.f32.mrf.mxu0
        %1795 = vdwg.mxu0
        %v1796 = vmul.f32 %v1766, 0.5
        %v1797 = vmul.f32 %v1769, 0.5
        %v1798 = vmul.f32 %v1774, 0.5
        %v1799 = vmul.f32 %v1777, 0.5
        %v1800 = vmul.f32 %v1782, 0.5
        %v1801 = vmul.f32 %v1785, 0.5
        %v1802 = vmul.f32 %v1790, 0.5
        %v1803 = vmul.f32 %v1793, 0.5
        %v1804 = vmul.f32 %v1766, 0.70710677
        %v1805 = vmul.f32 %v1769, 0.70710677
        %v1806 = vmul.f32 %v1774, 0.70710677
        %v1807 = vmul.f32 %v1777, 0.70710677
        %v1808 = vmul.f32 %v1782, 0.70710677
        %v1809 = vmul.f32 %v1785, 0.70710677
        %v1810 = vmul.f32 %v1790, 0.70710677
        %v1811 = vmul.f32 %v1793, 0.70710677
        %v1812 = verf.f32.pop %v1804
        %v1813 = verf.f32.pop %v1805
        %v1814 = verf.f32.pop %v1806
        %v1815 = verf.f32.pop %v1807
        %v1816 = verf.f32.pop %v1808
        %v1817 = verf.f32.pop %v1809
        %v1818 = verf.f32.pop %v1810
        %v1819 = verf.f32.pop %v1811
        %v1820 = vadd.f32 %v1812, 1.0
        %v1821 = vadd.f32 %v1813, 1.0
        %v1822 = vadd.f32 %v1814, 1.0
        %v1823 = vadd.f32 %v1815, 1.0
        %v1824 = vadd.f32 %v1816, 1.0
        %v1825 = vadd.f32 %v1817, 1.0
        %v1826 = vadd.f32 %v1818, 1.0
        %v1827 = vadd.f32 %v1819, 1.0
        %v1828 = vmul.f32 %v1796, %v1820
        %v1829 = vmul.f32 %v1797, %v1821
        %v1830 = vmul.f32 %v1798, %v1822
        %v1831 = vmul.f32 %v1799, %v1823
        %v1832 = vmul.f32 %v1800, %v1824
        %v1833 = vmul.f32 %v1801, %v1825
        %v1834 = vmul.f32 %v1802, %v1826
        %v1835 = vmul.f32 %v1803, %v1827
        %v1836 = vpack.c.bf16 %v1829, %v1828
        %v1837 = vpack.c.bf16 %v1831, %v1830
        %v1838 = vpack.c.bf16 %v1833, %v1832
        %v1839 = vpack.c.bf16 %v1835, %v1834
        %s1840 = smul.u32 %s34, 8
        %s1841 = smul.addr %s1840, 4
        %s1842 = scalar_lea.vmem %s13, %s1841
        %v1843 = vld [vmem:[%s1842] sm:$0xf]
        %v1844 = vld [vmem:[%s1842 + $0x4] sm:$0xf]
        %v1845 = vld [vmem:[%s1842 + $0x8] sm:$0xf]
        %v1846 = vld [vmem:[%s1842 + $0xc] sm:$0xf]
        %v1847 = vld [vmem:[%s1842 + $0x10] sm:$0xf]
        %v1848 = vld [vmem:[%s1842 + $0x14] sm:$0xf]
        %v1849 = vld [vmem:[%s1842 + $0x18] sm:$0xf]
        %v1850 = vld [vmem:[%s1842 + $0x1c] sm:$0xf]
        %s1851 = scalar_lea.vmem %s14, %s34
        %v1852 = vld [vmem:[%s1851] sm:$0x1]
        %v1854 = vlaneseq
        %v1855 = vshrl.u32 %v1854, 7
        %v1856 = vsub.s32 0, %v1855
        %v1857 = vrot.slane %v1852, %v1856
        %v1867 = vunpack.c.l.b16 %v1843
        %v1868 = vunpack.c.l.b16 %v1844
        %v1869 = vunpack.c.l.b16 %v1845
        %v1870 = vunpack.c.l.b16 %v1846
        %v1871 = vunpack.c.l.b16 %v1847
        %v1872 = vunpack.c.l.b16 %v1848
        %v1873 = vunpack.c.l.b16 %v1849
        %v1874 = vunpack.c.l.b16 %v1850
        %v1875 = vpack.c.b16 %v1868, %v1867
        %v1876 = vpack.c.b16 %v1870, %v1869
        %v1877 = vpack.c.b16 %v1872, %v1871
        %v1878 = vpack.c.b16 %v1874, %v1873
        %vm1883 = vcmask 523264
        %v1885 = vsel %vm1883, %v1836, 0
        %v1888 = vsel %vm1883, %v1837, 0
        %v1891 = vsel %vm1883, %v1838, 0
        %v1894 = vsel %vm1883, %v1839, 0
        %1896 = vmatprep.subr.bf16.mxu0 0
        %1897 = vmatpush1.bf16.msra.mxu0 0
        %1898 = vmatprep.subr.bf16.mxu0 0
        %1899 = vmatpush1.bf16.msra.mxu0 0
        %1900 = vmatprep.subr.bf16.mxu0 0
        %1901 = vmatpush1.bf16.msra.mxu0 0
        %1902 = vmatprep.subr.bf16.mxu0 0
        %1903 = vmatpush1.bf16.msra.mxu0 0
        %1904 = vmatprep.subr.bf16.mxu0 0
        %1905 = vmatpush1.bf16.msra.mxu0 %v1878
        %1906 = vmatprep.subr.bf16.mxu0 0
        %1907 = vmatpush1.bf16.msra.mxu0 %v1877
        %1908 = vmatprep.subr.bf16.mxu0 0
        %1909 = vmatpush1.bf16.msra.mxu0 %v1876
        %1910 = vmatprep.subr.bf16.mxu0 0
        %1911 = vmatpush1.bf16.msra.mxu0 %v1875
        %1912 = vmatprep.subr.bf16.mxu0 0
        %1913 = vmatpush2.bf16.msra.mxu0 0
        %1914 = vmatprep.subr.bf16.mxu0 0
        %1915 = vmatpush2.bf16.msra.mxu0 0
        %1916 = vmatprep.subr.bf16.mxu0 0
        %1917 = vmatpush2.bf16.msra.mxu0 0
        %1918 = vmatprep.subr.bf16.mxu0 0
        %1919 = vmatpush2.bf16.msra.mxu0 0
        %1920 = vmatprep.subr.bf16.mxu0 0
        %1921 = vmatpush2.bf16.msra.mxu0 0
        %1922 = vmatprep.subr.bf16.mxu0 0
        %1923 = vmatpush2.bf16.msra.mxu0 0
        %1924 = vmatprep.subr.bf16.mxu0 0
        %1925 = vmatpush2.bf16.msra.mxu0 0
        %1926 = vmatprep.subr.bf16.mxu0 0
        %1927 = vmatpush2.bf16.msra.mxu0 0
        %1928 = vmatprep.mubr.bf16.mxu0 0
        %1929 = vmatmul.mubr.bf16.gmra.mxu0 %v1885
        %v1930 = vpop.f32.mrf.mxu0
        %v1931 = vadd.f32 %v1857, %v1930
        %v1932 = vpop.f32.mrf.mxu0
        %v1933 = vpop.f32.mrf.mxu0
        %v1934 = vadd.f32 %v1857, %v1933
        %v1935 = vpop.f32.mrf.mxu0
        %1936 = vmatprep.mubr.bf16.mxu0 0
        %1937 = vmatmul.mubr.bf16.gmra.mxu0 %v1888
        %v1938 = vpop.f32.mrf.mxu0
        %v1939 = vadd.f32 %v1857, %v1938
        %v1940 = vpop.f32.mrf.mxu0
        %v1941 = vpop.f32.mrf.mxu0
        %v1942 = vadd.f32 %v1857, %v1941
        %v1943 = vpop.f32.mrf.mxu0
        %1944 = vmatprep.mubr.bf16.mxu0 0
        %1945 = vmatmul.mubr.bf16.gmra.mxu0 %v1891
        %v1946 = vpop.f32.mrf.mxu0
        %v1947 = vadd.f32 %v1857, %v1946
        %v1948 = vpop.f32.mrf.mxu0
        %v1949 = vpop.f32.mrf.mxu0
        %v1950 = vadd.f32 %v1857, %v1949
        %v1951 = vpop.f32.mrf.mxu0
        %1952 = vmatprep.mubr.bf16.mxu0 0
        %1953 = vmatmul.mubr.bf16.gmra.mxu0 %v1894
        %v1954 = vpop.f32.mrf.mxu0
        %v1955 = vadd.f32 %v1857, %v1954
        %v1956 = vpop.f32.mrf.mxu0
        %v1957 = vpop.f32.mrf.mxu0
        %v1958 = vadd.f32 %v1857, %v1957
        %v1959 = vpop.f32.mrf.mxu0
        %1960 = vdwg.mxu0
        %v1961 = vadd.f32 %v1525, %v1931
        %v1962 = vadd.f32 %v1526, %v1934
        %v1963 = vadd.f32 %v1527, %v1939
        %v1964 = vadd.f32 %v1528, %v1942
        %v1965 = vadd.f32 %v1529, %v1947
        %v1966 = vadd.f32 %v1530, %v1950
        %v1967 = vadd.f32 %v1531, %v1955
        %v1968 = vadd.f32 %v1532, %v1958
        %p1969 = scmp.lt.s32.totalorder %s34, 1
        // Predicated region
        $region93: #{tpu_custom_call.1} parent=87 // pred_check
          %p1970 = pneg %p1969
        $region94: #{tpu_custom_call.1} parent=87 // pred_check_branch
          %1972 = sbr.rel (%p1970) target = $region96
        $region95: #{tpu_custom_call.1} parent=87 // pred_region
          %1973 = vst [vmem:[#allocation2] sm:$0xff] %v1961
          %1974 = vst [vmem:[#allocation2 + $0x8] sm:$0xff] %v1962
          %1975 = vst [vmem:[#allocation2 + $0x10] sm:$0xff] %v1963
          %1976 = vst [vmem:[#allocation2 + $0x18] sm:$0xff] %v1964
          %1977 = vst [vmem:[#allocation2 + $0x20] sm:$0xff] %v1965
          %1978 = vst [vmem:[#allocation2 + $0x28] sm:$0xff] %v1966
          %1979 = vst [vmem:[#allocation2 + $0x30] sm:$0xff] %v1967
          %1980 = vst [vmem:[#allocation2 + $0x38] sm:$0xff] %v1968
        $region96: #{tpu_custom_call.1} parent=87 // pred_fallthru
          _
        %p1981 = scmp.eq.s32.totalorder %s34, 1
        // Predicated region
        $region97: #{tpu_custom_call.1} parent=87 // pred_check
          %p1982 = pneg %p1981
        $region98: #{tpu_custom_call.1} parent=87 // pred_check_branch
          %1984 = sbr.rel (%p1982) target = $region100
        $region99: #{tpu_custom_call.1} parent=87 // pred_region
          %v1985 = vld [vmem:[%s15] sm:$0x1]
          %v1986 = vld [vmem:[%s16] sm:$0x1]
          %1987 = vadd.xlane.f32.xlu0 %v1961
          %v1988 = vpop.xlane.xlu0 %1987
          %1989 = vadd.xlane.f32.xlu0 %v1962
          %v1990 = vpop.xlane.xlu0 %1989
          %1991 = vadd.xlane.f32.xlu0 %v1963
          %v1992 = vpop.xlane.xlu0 %1991
          %1993 = vadd.xlane.f32.xlu0 %v1964
          %v1994 = vpop.xlane.xlu0 %1993
          %1995 = vadd.xlane.f32.xlu0 %v1965
          %v1996 = vpop.xlane.xlu0 %1995
          %1997 = vadd.xlane.f32.xlu0 %v1966
          %v1998 = vpop.xlane.xlu0 %1997
          %1999 = vadd.xlane.f32.xlu0 %v1967
          %v2000 = vpop.xlane.xlu0 %1999
          %2001 = vadd.xlane.f32.xlu0 %v1968
          %v2002 = vpop.xlane.xlu0 %2001
          %v2003 = vmul.f32 %v1988, %v725
          %v2004 = vmul.f32 %v1990, %v725
          %v2005 = vmul.f32 %v1992, %v725
          %v2006 = vmul.f32 %v1994, %v725
          %v2007 = vmul.f32 %v1996, %v725
          %v2008 = vmul.f32 %v1998, %v725
          %v2009 = vmul.f32 %v2000, %v725
          %v2010 = vmul.f32 %v2002, %v725
          %v2011 = vsub.f32 %v1961, %v2003
          %v2012 = vsub.f32 %v1962, %v2004
          %v2013 = vsub.f32 %v1963, %v2005
          %v2014 = vsub.f32 %v1964, %v2006
          %v2015 = vsub.f32 %v1965, %v2007
          %v2016 = vsub.f32 %v1966, %v2008
          %v2017 = vsub.f32 %v1967, %v2009
          %v2018 = vsub.f32 %v1968, %v2010
          %v2019 = vmul.f32 %v2011, %v2011
          %v2020 = vmul.f32 %v2012, %v2012
          %v2021 = vmul.f32 %v2013, %v2013
          %v2022 = vmul.f32 %v2014, %v2014
          %v2023 = vmul.f32 %v2015, %v2015
          %v2024 = vmul.f32 %v2016, %v2016
          %v2025 = vmul.f32 %v2017, %v2017
          %v2026 = vmul.f32 %v2018, %v2018
          %2027 = vadd.xlane.f32.xlu0 %v2019
          %v2028 = vpop.xlane.xlu0 %2027
          %2029 = vadd.xlane.f32.xlu0 %v2020
          %v2030 = vpop.xlane.xlu0 %2029
          %2031 = vadd.xlane.f32.xlu0 %v2021
          %v2032 = vpop.xlane.xlu0 %2031
          %2033 = vadd.xlane.f32.xlu0 %v2022
          %v2034 = vpop.xlane.xlu0 %2033
          %2035 = vadd.xlane.f32.xlu0 %v2023
          %v2036 = vpop.xlane.xlu0 %2035
          %2037 = vadd.xlane.f32.xlu0 %v2024
          %v2038 = vpop.xlane.xlu0 %2037
          %2039 = vadd.xlane.f32.xlu0 %v2025
          %v2040 = vpop.xlane.xlu0 %2039
          %2041 = vadd.xlane.f32.xlu0 %v2026
          %v2042 = vpop.xlane.xlu0 %2041
          %v2043 = vmul.f32 %v2028, %v725
          %v2044 = vmul.f32 %v2030, %v725
          %v2045 = vmul.f32 %v2032, %v725
          %v2046 = vmul.f32 %v2034, %v725
          %v2047 = vmul.f32 %v2036, %v725
          %v2048 = vmul.f32 %v2038, %v725
          %v2049 = vmul.f32 %v2040, %v725
          %v2050 = vmul.f32 %v2042, %v725
          %v2051 = vadd.f32 %v2043, 1e-05
          %v2052 = vadd.f32 %v2044, 1e-05
          %v2053 = vadd.f32 %v2045, 1e-05
          %v2054 = vadd.f32 %v2046, 1e-05
          %v2055 = vadd.f32 %v2047, 1e-05
          %v2056 = vadd.f32 %v2048, 1e-05
          %v2057 = vadd.f32 %v2049, 1e-05
          %v2058 = vadd.f32 %v2050, 1e-05
          %v2059 = vrsqrt.pop %v2051
          %v2060 = vrsqrt.pop %v2052
          %v2061 = vrsqrt.pop %v2053
          %v2062 = vrsqrt.pop %v2054
          %v2063 = vrsqrt.pop %v2055
          %v2064 = vrsqrt.pop %v2056
          %v2065 = vrsqrt.pop %v2057
          %v2066 = vrsqrt.pop %v2058
          %v2067 = vmul.f32 %v2011, %v2059
          %v2068 = vmul.f32 %v2012, %v2060
          %v2069 = vmul.f32 %v2013, %v2061
          %v2070 = vmul.f32 %v2014, %v2062
          %v2071 = vmul.f32 %v2015, %v2063
          %v2072 = vmul.f32 %v2016, %v2064
          %v2073 = vmul.f32 %v2017, %v2065
          %v2074 = vmul.f32 %v2018, %v2066
          %v2076 = vlaneseq
          %v2077 = vshrl.u32 %v2076, 7
          %v2078 = vsub.s32 0, %v2077
          %v2079 = vrot.slane %v1985, %v2078
          %v2081 = vmul.f32 %v2067, %v2079
          %v2082 = vmul.f32 %v2068, %v2079
          %v2083 = vmul.f32 %v2069, %v2079
          %v2084 = vmul.f32 %v2070, %v2079
          %v2085 = vmul.f32 %v2071, %v2079
          %v2086 = vmul.f32 %v2072, %v2079
          %v2087 = vmul.f32 %v2073, %v2079
          %v2088 = vmul.f32 %v2074, %v2079
          %v2090 = vlaneseq
          %v2091 = vshrl.u32 %v2090, 7
          %v2092 = vsub.s32 0, %v2091
          %v2093 = vrot.slane %v1986, %v2092
          %v2095 = vadd.f32 %v2081, %v2093
          %v2096 = vadd.f32 %v2082, %v2093
          %v2097 = vadd.f32 %v2083, %v2093
          %v2098 = vadd.f32 %v2084, %v2093
          %v2099 = vadd.f32 %v2085, %v2093
          %v2100 = vadd.f32 %v2086, %v2093
          %v2101 = vadd.f32 %v2087, %v2093
          %v2102 = vadd.f32 %v2088, %v2093
          %2103 = vst [vmem:[#allocation2] sm:$0xff] %v2095
          %2104 = vst [vmem:[#allocation2 + $0x8] sm:$0xff] %v2096
          %2105 = vst [vmem:[#allocation2 + $0x10] sm:$0xff] %v2097
          %2106 = vst [vmem:[#allocation2 + $0x18] sm:$0xff] %v2098
          %2107 = vst [vmem:[#allocation2 + $0x20] sm:$0xff] %v2099
          %2108 = vst [vmem:[#allocation2 + $0x28] sm:$0xff] %v2100
          %2109 = vst [vmem:[#allocation2 + $0x30] sm:$0xff] %v2101
          %2110 = vst [vmem:[#allocation2 + $0x38] sm:$0xff] %v2102
        $region100: #{tpu_custom_call.1} parent=87 // pred_fallthru
          _
        // Predicated region
        $region101: #{tpu_custom_call.1} parent=87 // pred_check
          %p2111 = pneg %p421
        $region102: #{tpu_custom_call.1} parent=87 // pred_check_branch
          %2113 = sbr.rel (%p2111) target = $region104
        $region103: #{tpu_custom_call.1} parent=87 // pred_region
          %s2114 = smul.u32 8, %s33
          %s2116 = ssub.s32 1024, 1024
          %2117 = vsyncadd [#allocation3], %s2116
          %s2118 = smul.addr %s2114, 128
          %s2119 = scalar_lea.hbm %s17, %s2118
          %s2120 = sshll.u32 [#allocation2], 4
          %s2121 = int_to_ptr.vmem [resolvable:$true] %s2120
          %2126 = dma.vmem_to_hbm [thread:$0]  %s2121, 1024, %s2119, [#allocation3], 128, 128, 8
        $region104: #{tpu_custom_call.1} parent=87 // pred_fallthru
          _
        // Predicated region
        $region105: #{tpu_custom_call.1} parent=87 // pred_check
          %p2127 = pneg %p421
        $region106: #{tpu_custom_call.1} parent=87 // pred_check_branch
          %2129 = sbr.rel (%p2127) target = $region108
        $region107: #{tpu_custom_call.1} parent=87 // pred_region
          %2130 = dma.done [#allocation3], 1024
        $region108: #{tpu_custom_call.1} parent=87 // pred_fallthru
          _
      $region88: #{tpu_custom_call.1} parent=5 // pred_fallthru
        _
      %p2131 = scmp.le.s32.totalorder 2, %s24
      // Predicated region
      $region109: #{tpu_custom_call.1} parent=5 // pred_check
        %p2132 = pneg %p2131
      $region110: #{tpu_custom_call.1} parent=5 // pred_check_branch
        %2134 = sbr.rel (%p2132) target = $region112
      $region111: #{tpu_custom_call.1} parent=5 // pred_region
        %s2135 = ssub.s32 %s24, 2
      $region112: #{tpu_custom_call.1} parent=5 // pred_fallthru
        _
    $region6: #{tpu_custom_call.1} parent=1 // loop_footer
      %s28 = sadd.s32 1, %s24
    $region7: #{tpu_custom_call.1} parent=1 // loop_footer_branch
      %23 = sbr.rel target = $region3
    $region8: #{tpu_custom_call.1} parent=1 // loop_exit
      _
    %2136 = vsyncpa [#allocation3], 1
    %s2137 = scalar_lea.sflag [#allocation3], 1
    %2138 = vsyncpa %s2137, 1

</llo_original>
